<compile_context>
chip_gen: v6e
topology: v6e:2x2x1
jax: 0.10.0
libtpu: 0.0.40
codegen_flags: <defaults>
</compile_context>

<pallas_src>
import math
import functools

import jax
import jax.numpy as jnp
from jax.experimental import pallas as pl
from jax.experimental.pallas import tpu as pltpu


# ----------------------------------------------------------------------------
# helpers / chip-aware config
# ----------------------------------------------------------------------------
def _round_up(x, m):
    return (x + m - 1) // m * m


def _pad2(a, r, c):
    if r == 0 and c == 0:
        return a
    return jnp.pad(a, ((0, r), (0, c)))


def _mm_config():
    """(pref_tm, pref_tn, vmem_limit_bytes) per TPU generation."""
    kind = ""
    try:
        kind = jax.devices()[0].device_kind.lower()
    except Exception:
        pass
    if "v5" in kind:                 # v5e: 4x128^2 MXU -> keep tn=128, raise tm
        return 512, 128, 64 << 20
    if "v6" in kind:                 # v6e: 2x256^2 MXU, 128 MiB VMEM
        return 512, 256, 96 << 20
    if "7" in kind:                  # v7x: 64 MiB VMEM -> explicit 48 MiB budget
        return 512, 256, 48 << 20
    return 512, 256, 32 << 20        # unknown chip: conservative


_MM_TM, _MM_TN, _VMEM = _mm_config()
_K_FULL_MAX = 6144                   # full-K (no k grid axis) up to this K


# ----------------------------------------------------------------------------
# Pallas kernels
# ----------------------------------------------------------------------------
def _mm_fullk_kernel(*refs, relu, has_res):
    """Full-K matmul tile, fused bias (+ residual add) (+ ReLU) epilogue."""
    if has_res:
        x_ref, w_ref, b_ref, r_ref, o_ref = refs
    else:
        x_ref, w_ref, b_ref, o_ref = refs
        r_ref = None
    y = jnp.dot(x_ref[...], w_ref[...], preferred_element_type=jnp.float32)
    y = y + b_ref[0:1, :]
    if has_res:
        y = y + r_ref[...].astype(jnp.float32)
    if relu:
        y = jnp.maximum(y, 0.0)
    o_ref[...] = y.astype(o_ref.dtype)


def _mm_kernel(*refs, relu, has_res):
    """K-tiled matmul fallback (only used for K > _K_FULL_MAX)."""
    if has_res:
        x_ref, w_ref, b_ref, r_ref, o_ref, acc_ref = refs
    else:
        x_ref, w_ref, b_ref, o_ref, acc_ref = refs
        r_ref = None

    @pl.when(pl.program_id(2) == 0)
    def _():
        acc_ref[...] = jnp.zeros_like(acc_ref)

    acc_ref[...] += jnp.dot(x_ref[...], w_ref[...],
                            preferred_element_type=jnp.float32)

    @pl.when(pl.program_id(2) == pl.num_programs(2) - 1)
    def _():
        y = acc_ref[...] + b_ref[0:1, :]
        if has_res:
            y = y + r_ref[...].astype(jnp.float32)
        if relu:
            y = jnp.maximum(y, 0.0)
        o_ref[...] = y.astype(o_ref.dtype)


def _conv3x3_kernel(x_ref, w_ref, b_ref, o_ref, acc_ref, *, th, wp8):
    """Direct stride-1 3x3 conv, TH output rows per step (flattened M=TH*Wp8).

    x_ref  : (1, Hp*Wp8, Cin)  whole zero-padded image, resident across h steps
    w_ref  : (3, 3, Cin, Cout) full scale-folded weight, resident
    b_ref  : (8, Cout)         folded-BN bias (sublane replicated)
    o_ref  : (1, TH*Wp8, Cout) flattened padded output rows (garbage cols >= Wo)
    acc_ref: (TH*Wp8, Cout)    f32 VMEM accumulator
    """
    hb = pl.program_id(1)
    m = th * wp8
    for di in range(3):
        base = pl.multiple_of((hb * th + di) * wp8, 8)
        win = x_ref[0, pl.ds(base, m + 8), :]            # (m + 8, Cin) bf16
        for dj in range(3):
            contrib = jnp.dot(win[dj:dj + m, :], w_ref[di, dj],
                              preferred_element_type=jnp.float32)
            if di == 0 and dj == 0:
                acc_ref[...] = contrib
            else:
                acc_ref[...] += contrib
    y = jnp.maximum(acc_ref[...] + b_ref[0:1, :], 0.0)
    o_ref[0] = y.astype(o_ref.dtype)


def _maxpool_kernel(xe_ref, xo_ref, o_ref, *, thp, wo):
    """3x3/2 max-pool, THp output rows per step.  Inputs are the even / odd
    column splits of the zero-padded activation (post-ReLU, so zero padding is
    exact), resident in VMEM for a whole image."""
    hb = pl.program_id(1)
    for r in range(thp):
        base = 2 * (hb * thp + r)
        e3 = xe_ref[0, pl.ds(base, 3), :, :]             # (3, We, C)
        o3 = xo_ref[0, pl.ds(base, 3), :, :]             # (3, Wod, C)
        res = None
        for di in range(3):
            mrow = jnp.maximum(jnp.maximum(e3[di, 0:wo, :], o3[di, 0:wo, :]),
                               e3[di, 1:wo + 1, :])
            res = mrow if res is None else jnp.maximum(res, mrow)
        o_ref[0, r] = res


def _avgpool_kernel(x_ref, o_ref):
    o_ref[...] = jnp.mean(x_ref[...].astype(jnp.float32), axis=1).astype(o_ref.dtype)


# ----------------------------------------------------------------------------
# Pallas wrappers
# ----------------------------------------------------------------------------
def matmul_bias_act(x, w, bias, *, relu, residual=None, out_dtype=jnp.bfloat16):
    """y = act((x @ w) + bias [+ residual]);  x:(M,K) w:(K,N) bias:(N,)."""
    M, K = x.shape
    K2, N = w.shape
    assert K == K2

    pref_tm, pref_tn = _MM_TM, _MM_TN
    if M < 256:                      # small-M late stages: widen the N tile
        pref_tn = max(pref_tn, 512)

    # ---- N tiling (skip padding whenever possible)
    if N % 128 == 0:
        Np = N
        tn = pref_tn if N % pref_tn == 0 else (256 if N % 256 == 0 else 128)
        tn = min(tn, N)
    elif N <= pref_tn:
        Np, tn = N, N                # single full-width tile, no pad
    else:
        Np = _round_up(N, 128)
        tn = 128

    # ---- M tiling
    Mp = _round_up(M, 8)
    if Mp <= pref_tm:
        tm = Mp
    else:
        tm = pref_tm
        Mp = _round_up(M, tm)

    # ---- K: full-K (no reduction grid axis) for every ResNet layer
    full_k = K <= _K_FULL_MAX
    if full_k:
        Kp = K
    else:
        pref_tk = 512
        if K % 128 == 0:
            Kp = K
            tk = pref_tk if K % pref_tk == 0 else (256 if K % 256 == 0 else 128)
            tk = min(tk, K)
        else:
            Kp = _round_up(K, 128)
            tk = 128

    xp = _pad2(x.astype(jnp.bfloat16), Mp - M, Kp - K)
    wp = _pad2(w.astype(jnp.bfloat16), Kp - K, Np - N)
    b = bias.astype(jnp.float32)
    if Np != N:
        b = jnp.pad(b, (0, Np - N))
    brep = jnp.broadcast_to(b[None, :], (8, Np))          # sublane-aligned bias

    has_res = residual is not None
    inputs = [xp, wp, brep]
    if has_res:
        rp = _pad2(residual.astype(jnp.bfloat16), Mp - M, Np - N)
        inputs.append(rp)

    if full_k:
        in_specs = [
            pl.BlockSpec((tm, Kp), lambda i, j: (i, 0)),
            pl.BlockSpec((Kp, tn), lambda i, j: (0, j)),
            pl.BlockSpec((8, tn), lambda i, j: (0, j)),
        ]
        if has_res:
            in_specs.append(pl.BlockSpec((tm, tn), lambda i, j: (i, j)))
        kernel = functools.partial(_mm_fullk_kernel, relu=relu, has_res=has_res)
        out = pl.pallas_call(
            kernel,
            out_shape=jax.ShapeDtypeStruct((Mp, Np), out_dtype),
            grid_spec=pltpu.PrefetchScalarGridSpec(
                num_scalar_prefetch=0,
                grid=(Mp // tm, Np // tn),
                in_specs=in_specs,
                out_specs=pl.BlockSpec((tm, tn), lambda i, j: (i, j)),
            ),
            compiler_params=pltpu.CompilerParams(
                dimension_semantics=("parallel", "parallel"),
                vmem_limit_bytes=_VMEM),
        )(*inputs)
    else:
        in_specs = [
            pl.BlockSpec((tm, tk), lambda i, j, k: (i, k)),
            pl.BlockSpec((tk, tn), lambda i, j, k: (k, j)),
            pl.BlockSpec((8, tn), lambda i, j, k: (0, j)),
        ]
        if has_res:
            in_specs.append(pl.BlockSpec((tm, tn), lambda i, j, k: (i, j)))
        kernel = functools.partial(_mm_kernel, relu=relu, has_res=has_res)
        out = pl.pallas_call(
            kernel,
            out_shape=jax.ShapeDtypeStruct((Mp, Np), out_dtype),
            grid_spec=pltpu.PrefetchScalarGridSpec(
                num_scalar_prefetch=0,
                grid=(Mp // tm, Np // tn, Kp // tk),
                in_specs=in_specs,
                out_specs=pl.BlockSpec((tm, tn), lambda i, j, k: (i, j)),
                scratch_shapes=[pltpu.VMEM((tm, tn), jnp.float32)],
            ),
            compiler_params=pltpu.CompilerParams(
                dimension_semantics=("parallel", "parallel", "arbitrary"),
                vmem_limit_bytes=_VMEM),
        )(*inputs)

    if Mp != M or Np != N:
        out = out[:M, :N]
    return out


def conv3x3_s1_bn_relu(x, w4, bias, *, target_m=512):
    """Stride-1 3x3 conv + folded BN + ReLU, no HBM im2col.
    x: (N,H,W,Cin) bf16; w4: (3,3,Cin,Cout) bf16 (scale-folded); bias: (Cout,)."""
    N, H, W, C = x.shape
    Cout = w4.shape[3]
    Ho, Wo = H, W
    Wp8 = _round_up(W + 2, 8)
    TH = min(Ho, max(1, target_m // Wp8))
    Ho_pad = _round_up(Ho, TH)
    Hp = Ho_pad + 3
    flat = Hp * Wp8

    # resident padded image (double buffered) must fit comfortably in VMEM
    if 2 * flat * C * 2 > _VMEM // 3:
        # TODO(synk): very large spatial inputs fall back to im2col + matmul.
        cols, (n1, h1, w1) = _im2col(x, 3, 1, 1)
        out = matmul_bias_act(cols, jnp.reshape(w4, (9 * C, Cout)), bias,
                              relu=True)
        return out.reshape(n1, h1, w1, Cout)

    xp = jnp.pad(x, ((0, 0), (1, Hp - 1 - H), (1, Wp8 - 1 - W), (0, 0)))
    af = xp.reshape(N, flat, C)
    brep = jnp.broadcast_to(bias.astype(jnp.float32)[None, :], (8, Cout))
    m = TH * Wp8

    out_flat = pl.pallas_call(
        functools.partial(_conv3x3_kernel, th=TH, wp8=Wp8),
        out_shape=jax.ShapeDtypeStruct((N, Ho_pad * Wp8, Cout), jnp.bfloat16),
        grid_spec=pltpu.PrefetchScalarGridSpec(
            num_scalar_prefetch=0,
            grid=(N, Ho_pad // TH),
            in_specs=[
                pl.BlockSpec((1, flat, C), lambda n, hb: (n, 0, 0)),
                pl.BlockSpec((3, 3, C, Cout), lambda n, hb: (0, 0, 0, 0)),
                pl.BlockSpec((8, Cout), lambda n, hb: (0, 0)),
            ],
            out_specs=pl.BlockSpec((1, m, Cout), lambda n, hb: (n, hb, 0)),
            scratch_shapes=[pltpu.VMEM((m, Cout), jnp.float32)],
        ),
        compiler_params=pltpu.CompilerParams(
            dimension_semantics=("parallel", "parallel"),
            vmem_limit_bytes=_VMEM),
    )(af, w4, brep)

    out = out_flat.reshape(N, Ho_pad, Wp8, Cout)[:, :Ho, :Wo, :]
    return out


def maxpool_3x3_s2_p1(x):
    """nn.MaxPool2d(kernel_size=3, stride=2, padding=1) in NHWC (bf16)."""
    N, H, W, C = x.shape
    Ho, Wo = (H - 1) // 2 + 1, (W - 1) // 2 + 1
    THp = min(Ho, 8)
    Ho_pad = _round_up(Ho, THp)
    Hp = 2 * Ho_pad + 1                                   # padded rows needed

    # zero padding is exact: input is post-ReLU (>= 0)
    xp = jnp.pad(x, ((0, 0), (1, Hp - 1 - H), (1, 1), (0, 0)))
    xe = xp[:, :, 0::2, :]                                # even padded columns
    xo = xp[:, :, 1::2, :]                                # odd padded columns
    We, Wod = xe.shape[2], xo.shape[2]

    out = pl.pallas_call(
        functools.partial(_maxpool_kernel, thp=THp, wo=Wo),
        out_shape=jax.ShapeDtypeStruct((N, Ho_pad, Wo, C), x.dtype),
        grid_spec=pltpu.PrefetchScalarGridSpec(
            num_scalar_prefetch=0,
            grid=(N, Ho_pad // THp),
            in_specs=[
                pl.BlockSpec((1, Hp, We, C), lambda n, hb: (n, 0, 0, 0)),
                pl.BlockSpec((1, Hp, Wod, C), lambda n, hb: (n, 0, 0, 0)),
            ],
            out_specs=pl.BlockSpec((1, THp, Wo, C), lambda n, hb: (n, hb, 0, 0)),
        ),
        compiler_params=pltpu.CompilerParams(
            dimension_semantics=("parallel", "parallel"),
            vmem_limit_bytes=_VMEM),
    )(xe, xo)
    return out[:, :Ho, :, :]


def global_avgpool(x):
    """nn.AdaptiveAvgPool2d((1,1)) + flatten, NHWC -> (N, C) bf16."""
    N, H, W, C = x.shape
    x3 = x.reshape(N, H * W, C)
    out = pl.pallas_call(
        _avgpool_kernel,
        out_shape=jax.ShapeDtypeStruct((N, C), jnp.bfloat16),
        grid_spec=pltpu.PrefetchScalarGridSpec(
            num_scalar_prefetch=0,
            grid=(1,),
            in_specs=[pl.BlockSpec((N, H * W, C), lambda j: (0, 0, 0))],
            out_specs=pl.BlockSpec((N, C), lambda j: (0, 0)),
        ),
        compiler_params=pltpu.CompilerParams(
            dimension_semantics=("arbitrary",),
            vmem_limit_bytes=_VMEM),
    )(x3)
    return out


# ----------------------------------------------------------------------------
# im2col (only for the 7x7 stem, stride-2 3x3 convs and strided 1x1 downsample)
# ----------------------------------------------------------------------------
def _im2col(x, k, stride, pad):
    N, H, W, C = x.shape
    if pad:
        x = jnp.pad(x, ((0, 0), (pad, pad), (pad, pad), (0, 0)))
    Ho = (H + 2 * pad - k) // stride + 1
    Wo = (W + 2 * pad - k) // stride + 1
    patches = [x[:, i:i + stride * Ho:stride, j:j + stride * Wo:stride, :]
               for i in range(k) for j in range(k)]
    cols = jnp.concatenate(patches, axis=-1) if len(patches) > 1 else patches[0]
    return cols.reshape(N * Ho * Wo, k * k * C), (N, Ho, Wo)


# ----------------------------------------------------------------------------
# deterministic synthetic parameters for ResNet-152
# ----------------------------------------------------------------------------
class _KeyGen:
    def __init__(self, seed):
        self.key = jax.random.PRNGKey(seed)

    def __call__(self):
        self.key, sub = jax.random.split(self.key)
        return sub


def _init_conv(kg, cout, cin, k, gain=1.0):
    fan_in = cin * k * k
    std = gain * math.sqrt(2.0 / fan_in)
    return std * jax.random.normal(kg(), (cout, cin, k, k), jnp.float32)


def _init_bn(kg, c, eps=1e-5):
    gamma = 1.0 + 0.05 * jax.random.normal(kg(), (c,), jnp.float32)
    beta = 0.05 * jax.random.normal(kg(), (c,), jnp.float32)
    mean = 0.05 * jax.random.normal(kg(), (c,), jnp.float32)
    var = jnp.ones((c,), jnp.float32)
    scale = gamma / jnp.sqrt(var + eps)
    bias = beta - mean * scale
    return scale, bias


def init_resnet152_params(seed=0, num_classes=2):
    kg = _KeyGen(seed)
    p = {}
    p['conv1_w'] = _init_conv(kg, 64, 3, 7)
    p['bn1'] = _init_bn(kg, 64)

    blocks = []
    inplanes = 64
    # ResNet-152 bottleneck configuration: [3, 8, 36, 3]
    cfg = [(64, 3, 1), (128, 8, 2), (256, 36, 2), (512, 3, 2)]
    for planes, nblocks, stride in cfg:
        for b in range(nblocks):
            s = stride if b == 0 else 1
            blk = {'stride': s}
            blk['w1'] = _init_conv(kg, planes, inplanes, 1)
            blk['bn1'] = _init_bn(kg, planes)
            blk['w2'] = _init_conv(kg, planes, planes, 3)
            blk['bn2'] = _init_bn(kg, planes)
            # keep residual branch small so the 50-block stack stays well-scaled
            blk['w3'] = _init_conv(kg, planes * 4, planes, 1, gain=0.2)
            blk['bn3'] = _init_bn(kg, planes * 4)
            if b == 0:  # downsample (1x1 conv + BN, no ReLU)
                blk['wd'] = _init_conv(kg, planes * 4, inplanes, 1)
                blk['bnd'] = _init_bn(kg, planes * 4)
            blocks.append(blk)
            inplanes = planes * 4
    p['blocks'] = blocks

    p['fc_w'] = 0.01 * jax.random.normal(kg(), (num_classes, 2048), jnp.float32)
    p['fc_b'] = jnp.zeros((num_classes,), jnp.float32)
    return p


# ----------------------------------------------------------------------------
# one-time parameter preparation: fold BN scale into conv weights, transpose to
# matmul layouts, cast to bf16  (eval-mode BN; exact rewrite of conv+BN)
# ----------------------------------------------------------------------------
def _prep_conv_mat(w, scale, bias):
    cout, cin, kh, kw = w.shape
    wf = w * scale[:, None, None, None]
    wmat = jnp.transpose(wf, (2, 3, 1, 0)).reshape(kh * kw * cin, cout)
    return wmat.astype(jnp.bfloat16), bias.astype(jnp.float32)


def _prep_conv3x3_direct(w, scale, bias):
    wf = w * scale[:, None, None, None]
    w4 = jnp.transpose(wf, (2, 3, 1, 0))                   # (3, 3, Cin, Cout)
    return w4.astype(jnp.bfloat16), bias.astype(jnp.float32)


def prepare_params(p):
    prep = {}
    prep['stem_w'], prep['stem_b'] = _prep_conv_mat(p['conv1_w'], *p['bn1'])
    blocks = []
    for blk in p['blocks']:
        b = {'stride': blk['stride']}
        b['w1'], b['b1'] = _prep_conv_mat(blk['w1'], *blk['bn1'])
        if blk['stride'] == 1:
            b['w2'], b['b2'] = _prep_conv3x3_direct(blk['w2'], *blk['bn2'])
        else:
            b['w2'], b['b2'] = _prep_conv_mat(blk['w2'], *blk['bn2'])
        b['w3'], b['b3'] = _prep_conv_mat(blk['w3'], *blk['bn3'])
        if 'wd' in blk:
            b['wd'], b['bd'] = _prep_conv_mat(blk['wd'], *blk['bnd'])
        blocks.append(b)
    prep['blocks'] = blocks
    prep['fc_w'] = jnp.asarray(p['fc_w'].T, jnp.bfloat16)   # (2048, num_classes)
    prep['fc_b'] = p['fc_b'].astype(jnp.float32)
    return prep


# ----------------------------------------------------------------------------
# forward pass (mirrors Resnet152.forward)
# ----------------------------------------------------------------------------
def resnet152_forward(prep, x_nchw):
    # NCHW (PyTorch) -> NHWC bf16 (kernel layout)
    x = jnp.transpose(x_nchw, (0, 2, 3, 1)).astype(jnp.bfloat16)

    # stem: 7x7/2 conv + BN + ReLU, then 3x3/2 maxpool
    cols, (n, ho, wo) = _im2col(x, 7, 2, 3)
    x = matmul_bias_act(cols, prep['stem_w'], prep['stem_b'], relu=True)
    x = x.reshape(n, ho, wo, -1)
    x = maxpool_3x3_s2_p1(x)

    for blk in prep['blocks']:
        identity = x
        n0, h0, w0, c0 = x.shape

        # 1x1 reduce
        out = matmul_bias_act(x.reshape(n0 * h0 * w0, c0), blk['w1'], blk['b1'],
                              relu=True).reshape(n0, h0, w0, -1)

        # 3x3 (direct kernel for stride 1, im2col path for the 3 stride-2 convs)
        if blk['stride'] == 1:
            out = conv3x3_s1_bn_relu(out, blk['w2'], blk['b2'])
        else:
            cols, (n1, h1, w1) = _im2col(out, 3, blk['stride'], 1)
            out = matmul_bias_act(cols, blk['w2'], blk['b2'],
                                  relu=True).reshape(n1, h1, w1, -1)

        # downsample branch (1x1 conv + BN, no ReLU)
        if 'wd' in blk:
            dcols, (n2, h2, w2) = _im2col(x, 1, blk['stride'], 0)
            identity = matmul_bias_act(dcols, blk['wd'], blk['bd'],
                                       relu=False).reshape(n2, h2, w2, -1)

        # 1x1 expand with fused BN + residual-add + ReLU epilogue
        n3, h3, w3, c3 = out.shape
        cexp = blk['w3'].shape[1]
        y = matmul_bias_act(out.reshape(n3 * h3 * w3, c3), blk['w3'], blk['b3'],
                            relu=True,
                            residual=identity.reshape(n3 * h3 * w3, cexp))
        x = y.reshape(n3, h3, w3, cexp)

    feat = global_avgpool(x)                                   # (N, 2048)
    logits = matmul_bias_act(feat, prep['fc_w'], prep['fc_b'],
                             relu=False, out_dtype=jnp.float32)
    return logits


# ----------------------------------------------------------------------------
if __name__ == "__main__":
    num_classes = 2
    params = init_resnet152_params(seed=0, num_classes=num_classes)
    prep = prepare_params(params)

    key = jax.random.PRNGKey(0)
    x = jax.random.normal(key, (2, 3, 64, 64), jnp.float32)   # small NCHW input

    logits = resnet152_forward(prep, x)
    logits = jax.block_until_ready(logits)

    assert logits.shape == (2, num_classes), logits.shape
    assert bool(jnp.all(jnp.isfinite(logits)))
    print("KERNEL_OK")
</pallas_src>

<mosaic_0001>
module attributes {stable_mosaic.version = 11 : i64} {
  func.func @_mm_fullk_kernel(%arg0: i32, %arg1: i32, %arg2: memref<512x147xbf16, #tpu.memory_space<vmem>>, %arg3: memref<147x64xbf16, #tpu.memory_space<vmem>>, %arg4: memref<8x64xf32, #tpu.memory_space<vmem>>, %arg5: memref<512x64xbf16, #tpu.memory_space<vmem>>) attributes {dimension_semantics = [#tpu.dimension_semantics<parallel>, #tpu.dimension_semantics<parallel>], iteration_bounds = array<i64: 4, 1>, scalar_prefetch = 0 : i64, scratch_operands = 0 : i64, tpu.core_type = #tpu.core_type<tc>, window_params = [{transform_indices = @transform_0, window_bounds = array<i64: 512, 147>}, {transform_indices = @transform_1, window_bounds = array<i64: 147, 64>}, {transform_indices = @transform_2, window_bounds = array<i64: 8, 64>}, {transform_indices = @transform_3, window_bounds = array<i64: 512, 64>}]} {
    %c0 = arith.constant 0 : index
    %c0_0 = arith.constant 0 : index
    %0 = vector.load %arg2[%c0, %c0_0] : memref<512x147xbf16, #tpu.memory_space<vmem>>, vector<512x147xbf16>
    %c0_1 = arith.constant 0 : index
    %c0_2 = arith.constant 0 : index
    %1 = vector.load %arg3[%c0_1, %c0_2] : memref<147x64xbf16, #tpu.memory_space<vmem>>, vector<147x64xbf16>
    %cst = arith.constant dense<0.000000e+00> : vector<512x64xf32>
    %2 = tpu.matmul %0, %1, %cst {dimension_numbers = #tpu.dot_dimension_numbers<[1], [0], [0], [1], [0, 0, 1, 1], [], []>} : vector<512x147xbf16>, vector<147x64xbf16>, vector<512x64xf32> -> vector<512x64xf32>
    %c0_3 = arith.constant 0 : index
    %c0_4 = arith.constant 0 : index
    %3 = vector.load %arg4[%c0_3, %c0_4] : memref<8x64xf32, #tpu.memory_space<vmem>>, vector<1x64xf32>
    %4 = vector.broadcast %3 : vector<1x64xf32> to vector<512x64xf32>
    %5 = arith.addf %2, %4 : vector<512x64xf32>
    %cst_5 = arith.constant 0.000000e+00 : f32
    %6 = vector.broadcast %cst_5 : f32 to vector<512x64xf32>
    %7 = arith.maximumf %5, %6 : vector<512x64xf32>
    %8 = arith.truncf %7 : vector<512x64xf32> to vector<512x64xbf16>
    %c0_6 = arith.constant 0 : index
    %c0_7 = arith.constant 0 : index
    %9 = vector.load %arg5[%c0_6, %c0_7] : memref<512x64xbf16, #tpu.memory_space<vmem>>, vector<512x64xbf16>
    tpu.vector_store %arg5[%c0_6, %c0_7], %8 {strides = array<i32>} : memref<512x64xbf16, #tpu.memory_space<vmem>>, vector<512x64xbf16>,
    return
  }
  func.func @transform_0(%arg0: i32, %arg1: i32) -> (i32, i32) {
    %c0_i32 = arith.constant 0 : i32
    %c0_i32_0 = arith.constant 0 : i32
    return %arg0, %c0_i32 : i32, i32
  }
  func.func @transform_1(%arg0: i32, %arg1: i32) -> (i32, i32) {
    %c0_i32 = arith.constant 0 : i32
    %c0_i32_0 = arith.constant 0 : i32
    return %c0_i32, %arg1 : i32, i32
  }
  func.func @transform_2(%arg0: i32, %arg1: i32) -> (i32, i32) {
    %c0_i32 = arith.constant 0 : i32
    %c0_i32_0 = arith.constant 0 : i32
    return %c0_i32, %arg1 : i32, i32
  }
  func.func @transform_3(%arg0: i32, %arg1: i32) -> (i32, i32) {
    %c0_i32 = arith.constant 0 : i32
    return %arg0, %arg1 : i32, i32
  }
}

</mosaic_0001>

<llo_original>
// kernel: tpu_custom_call.1
$region0: #{tpu_custom_call.1}
  #allocation0 [shape = 'u32[]', space=smem, size = 0x4, offset = 0x4, fixed_abs, tag = 'smem constant byte address 0x4 - core index']
  #allocation1 [shape = 'u32[144,128]{1,0:T(1,128)}', space=vmem, size = 0x12000, scoped, tag = 'internal scratch']
  %s0 = inlined_call_operand.vmem [shape: bf16[2048,147], index: 0, kind: input, shape index: {}]
  %s1 = inlined_call_operand.vmem [shape: bf16[147,64], index: 1, kind: input, shape index: {}]
  %s2 = inlined_call_operand.vmem [shape: f32[8,64], index: 2, kind: input, shape index: {}]
  %s3 = inlined_call_operand.vmem [shape: bf16[2048,64], index: 3, kind: output, shape index: {}]
  %s4 = sld [smem:[#allocation0]]
  $region45: #{tpu_custom_call.1} parent=0
    _
  %s6 = ssub.s32 1, %s4
  %s7 = scalar_select 0, %s6, %s4
  loop: start=0, step=1, limit=6
  $region2: #{tpu_custom_call.1} parent=0 // loop_pre_header
    _
  $region3: #{tpu_custom_call.1} parent=0 // loop_header
    %s9 = sphi 0, %s13
    %p10 = scmp.ge.s32.totalorder %s9, 6
    %s16 = sphi 0, %s28
    %s17 = sphi 0, %s24
    %s18 = sphi 0, %s16
    %s19 = sphi 0, %s17
    %s20 = sphi 0, %s18
    %s21 = sphi 0, %s19
    %s31 = sphi 0, %s33
    %s34 = sphi 0, %s31
    %s35 = sphi 0, %s34
    %s51 = sphi 0, %s35
    %s57 = sphi 0, %s59
    %s60 = sphi 0, %s57
    %s61 = sphi 0, %s60
    %s77 = sphi 0, %s61
    %s83 = sphi 0, %s85
    %s86 = sphi 0, %s83
    %s87 = sphi 0, %s86
    %s103 = sphi 0, %s87
    %s111 = sphi 0, %s113
    %s114 = sphi 0, %s111
    %s115 = sphi 0, %s114
    %s131 = sphi 0, %s115
  $region4: #{tpu_custom_call.1} parent=0 // loop_header_branch
    %12 = sbr.rel (%p10) target = $region8
  $region5: #{tpu_custom_call.1} parent=0 // loop_body
    %s14 = ssub.s32 %s9, 1
    %s15 = ssub.s32 %s9, 2
    %s22 = sadd.s32 1, %s17
    %p23 = scmp.ge.s32.totalorder %s22, 1
    %s24 = scalar_select %p23, 0, %s22
    %s25 = sadd.s32 1, %s16
    %s26 = scalar_select %p23, %s25, %s16
    %p27 = scmp.ge.s32.totalorder %s26, 4
    %s28 = scalar_select %p27, 0, %s26
    %s29 = ssub.s32 %s16, %s28
    %p30 = scmp.eq.s32.totalorder %s29, 0
    %s32 = sadd.s32 %s31, 1
    %s33 = scalar_select %p30, %s31, %s32
    %p36 = pneg %p30
    %p37 = scmp.eq.s32.totalorder %s9, 3
    %p38 = por %p36, %p37
    %p39 = scmp.ne.s32.totalorder %s31, %s34
    %p40 = scmp.eq.s32.totalorder %s9, 0
    %p41 = por %p39, %p40
    %p42 = scmp.ne.s32.totalorder %s31, %s34
    %p43 = scmp.eq.s32.totalorder %s14, 3
    %p44 = por %p42, %p43
    %p45 = scmp.ne.s32.totalorder %s34, %s35
    %p46 = scmp.eq.s32.totalorder %s14, 0
    %p47 = por %p45, %p46
    %p48 = scmp.ne.s32.totalorder %s34, %s35
    %p49 = scmp.eq.s32.totalorder %s15, 3
    %p50 = por %p48, %p49
    %p52 = scmp.ne.s32.totalorder %s35, %s51
    %p53 = scmp.eq.s32.totalorder %s15, 0
    %p54 = por %p52, %p53
    %s55 = ssub.s32 %s17, %s24
    %p56 = scmp.eq.s32.totalorder %s55, 0
    %s58 = sadd.s32 %s57, 1
    %s59 = scalar_select %p56, %s57, %s58
    %p62 = pneg %p56
    %p63 = scmp.eq.s32.totalorder %s9, 3
    %p64 = por %p62, %p63
    %p65 = scmp.ne.s32.totalorder %s57, %s60
    %p66 = scmp.eq.s32.totalorder %s9, 0
    %p67 = por %p65, %p66
    %p68 = scmp.ne.s32.totalorder %s57, %s60
    %p69 = scmp.eq.s32.totalorder %s14, 3
    %p70 = por %p68, %p69
    %p71 = scmp.ne.s32.totalorder %s60, %s61
    %p72 = scmp.eq.s32.totalorder %s14, 0
    %p73 = por %p71, %p72
    %p74 = scmp.ne.s32.totalorder %s60, %s61
    %p75 = scmp.eq.s32.totalorder %s15, 3
    %p76 = por %p74, %p75
    %p78 = scmp.ne.s32.totalorder %s61, %s77
    %p79 = scmp.eq.s32.totalorder %s15, 0
    %p80 = por %p78, %p79
    %s81 = ssub.s32 %s17, %s24
    %p82 = scmp.eq.s32.totalorder %s81, 0
    %s84 = sadd.s32 %s83, 1
    %s85 = scalar_select %p82, %s83, %s84
    %p88 = pneg %p82
    %p89 = scmp.eq.s32.totalorder %s9, 3
    %p90 = por %p88, %p89
    %p91 = scmp.ne.s32.totalorder %s83, %s86
    %p92 = scmp.eq.s32.totalorder %s9, 0
    %p93 = por %p91, %p92
    %p94 = scmp.ne.s32.totalorder %s83, %s86
    %p95 = scmp.eq.s32.totalorder %s14, 3
    %p96 = por %p94, %p95
    %p97 = scmp.ne.s32.totalorder %s86, %s87
    %p98 = scmp.eq.s32.totalorder %s14, 0
    %p99 = por %p97, %p98
    %p100 = scmp.ne.s32.totalorder %s86, %s87
    %p101 = scmp.eq.s32.totalorder %s15, 3
    %p102 = por %p100, %p101
    %p104 = scmp.ne.s32.totalorder %s87, %s103
    %p105 = scmp.eq.s32.totalorder %s15, 0
    %p106 = por %p104, %p105
    %s107 = ssub.s32 %s16, %s28
    %s108 = ssub.s32 %s17, %s24
    %s109 = sor.u32 %s107, %s108
    %p110 = scmp.eq.s32.totalorder %s109, 0
    %s112 = sadd.s32 %s111, 1
    %s113 = scalar_select %p110, %s111, %s112
    %p116 = pneg %p110
    %p117 = scmp.eq.s32.totalorder %s9, 3
    %p118 = por %p116, %p117
    %p119 = scmp.ne.s32.totalorder %s111, %s114
    %p120 = scmp.eq.s32.totalorder %s9, 0
    %p121 = por %p119, %p120
    %p122 = scmp.ne.s32.totalorder %s111, %s114
    %p123 = scmp.eq.s32.totalorder %s14, 3
    %p124 = por %p122, %p123
    %p125 = scmp.ne.s32.totalorder %s114, %s115
    %p126 = scmp.eq.s32.totalorder %s14, 0
    %p127 = por %p125, %p126
    %p128 = scmp.ne.s32.totalorder %s114, %s115
    %p129 = scmp.eq.s32.totalorder %s15, 3
    %p130 = por %p128, %p129
    %p132 = scmp.ne.s32.totalorder %s115, %s131
    %p133 = scmp.eq.s32.totalorder %s15, 0
    %p134 = por %p132, %p133
    %p135 = scmp.le.s32.totalorder 1, %s9
    %p136 = scmp.lt.s32.totalorder %s9, 5
    %p137 = pnand %p135, %p136
    %p138 = pneg %p137
    // Predicated region
    $region9: #{tpu_custom_call.1} parent=5 // pred_check
      _
    $region10: #{tpu_custom_call.1} parent=5 // pred_check_branch
      %140 = sbr.rel (%p137) target = $region12
    $region11: #{tpu_custom_call.1} parent=5 // pred_region
      %s141 = ssub.s32 %s9, 1
      // Predicated region
      $region13: #{tpu_custom_call.1} parent=11 // pred_check
        %p142 = pneg %p73
      $region14: #{tpu_custom_call.1} parent=11 // pred_check_branch
        %144 = sbr.rel (%p142) target = $region16
      $region15: #{tpu_custom_call.1} parent=11 // pred_region
        %p145 = scmp.lt.s32.totalorder %s19, 0
        %s146 = scalar_select %p145, %s19, 0
        %s147 = smul.addr %s146, 4
        %s148 = scalar_lea.vmem %s1, %s147
      $region16: #{tpu_custom_call.1} parent=11 // pred_fallthru
        _
      // Predicated region
      $region17: #{tpu_custom_call.1} parent=11 // pred_check
        %p149 = pneg %p99
      $region18: #{tpu_custom_call.1} parent=11 // pred_check_branch
        %151 = sbr.rel (%p149) target = $region20
      $region19: #{tpu_custom_call.1} parent=11 // pred_region
        %p152 = scmp.lt.s32.totalorder %s19, 0
        %s153 = scalar_select %p152, %s19, 0
        %s154 = smul.addr %s153, 8
        %s155 = scalar_lea.vmem %s2, %s154
      $region20: #{tpu_custom_call.1} parent=11 // pred_fallthru
        _
    $region12: #{tpu_custom_call.1} parent=5 // pred_fallthru
      _
    %p156 = scmp.lt.s32.totalorder %s9, 4
    // Predicated region
    $region21: #{tpu_custom_call.1} parent=5 // pred_check
      %p157 = pneg %p156
    $region22: #{tpu_custom_call.1} parent=5 // pred_check_branch
      %159 = sbr.rel (%p157) target = $region24
    $region23: #{tpu_custom_call.1} parent=5 // pred_region
      // Predicated region
      $region25: #{tpu_custom_call.1} parent=23 // pred_check
        %p160 = pneg %p41
      $region26: #{tpu_custom_call.1} parent=23 // pred_check_branch
        %162 = sbr.rel (%p160) target = $region28
      $region27: #{tpu_custom_call.1} parent=23 // pred_region
        %s163 = smul.u32 64, %s16
        %p164 = scmp.lt.s32.totalorder %s163, 255
        %s165 = scalar_select %p164, %s163, 255
        %s166 = smul.addr %s165, 2
        %s167 = smul.addr %s166, 4
        %s168 = scalar_lea.vmem %s0, %s167
        %s169 = smul.u32 64, %s16
      $region28: #{tpu_custom_call.1} parent=23 // pred_fallthru
        _
    $region24: #{tpu_custom_call.1} parent=5 // pred_fallthru
      _
    %p170 = scmp.le.s32.totalorder 1, %s9
    %p171 = scmp.lt.s32.totalorder %s9, 5
    %p172 = pnand %p170, %p171
    %p173 = pneg %p172
    // Predicated region
    $region29: #{tpu_custom_call.1} parent=5 // pred_check
      _
    $region30: #{tpu_custom_call.1} parent=5 // pred_check_branch
      %175 = sbr.rel (%p172) target = $region32
    $region31: #{tpu_custom_call.1} parent=5 // pred_region
      %s176 = ssub.s32 %s9, 1
      %s177 = smul.u32 64, %s18
      %p178 = scmp.lt.s32.totalorder %s177, 255
      %s179 = scalar_select %p178, %s177, 255
      %s180 = smul.addr %s179, 2
      %s181 = smul.addr %s180, 4
      %s182 = scalar_lea.vmem %s0, %s181
      %p183 = pneg %p47
      %p184 = pneg %p44
      %p185 = scmp.lt.s32.totalorder %s19, 0
      %s186 = scalar_select %p185, %s19, 0
      %s187 = smul.addr %s186, 4
      %s188 = scalar_lea.vmem %s1, %s187
      %p189 = pneg %p73
      %p190 = pneg %p70
      %p191 = scmp.lt.s32.totalorder %s19, 0
      %s192 = scalar_select %p191, %s19, 0
      %s193 = smul.addr %s192, 8
      %s194 = scalar_lea.vmem %s2, %s193
      %p195 = pneg %p99
      %p196 = pneg %p96
      %p197 = pneg %p127
      %p198 = pneg %p124
      %s199 = smul.u32 64, %s18
      %p200 = scmp.lt.s32.totalorder %s199, 255
      %s201 = scalar_select %p200, %s199, 255
      %p202 = scmp.lt.s32.totalorder %s19, 0
      %s203 = scalar_select %p202, %s19, 0
      %s204 = sadd.s32 %s203, %s201
      %s205 = smul.addr %s204, 4
      %s206 = scalar_lea.vmem %s3, %s205
      %s207 = smul.u32 64, %s18
      %p208 = scmp.lt.s32.totalorder %s207, 255
      %s209 = scalar_select %p208, %s207, 255
      %s210 = smul.addr %s209, 2
      %s211 = smul.addr %s210, 4
      %s212 = scalar_lea.vmem %s0, %s211
      %s213 = smul.u32 64, %s18
      %p214 = scmp.lt.s32.totalorder %s19, 0
      %s215 = scalar_select %p214, %s19, 0
      %s216 = smul.addr %s215, 4
      %s217 = scalar_lea.vmem %s1, %s216
      %p218 = scmp.lt.s32.totalorder %s19, 0
      %s219 = scalar_select %p218, %s19, 0
      %s220 = smul.addr %s219, 8
      %s221 = scalar_lea.vmem %s2, %s220
      %s222 = smul.u32 64, %s18
      %p223 = scmp.lt.s32.totalorder %s222, 255
      %s224 = scalar_select %p223, %s222, 255
      %p225 = scmp.lt.s32.totalorder %s19, 0
      %s226 = scalar_select %p225, %s19, 0
      %s227 = sadd.s32 %s226, %s224
      %s228 = smul.addr %s227, 4
      %s229 = scalar_lea.vmem %s3, %s228
      %s230 = smul.u32 64, %s18
      %v232 = vld [vmem:[%s212] sm:$0xff]
      %v233 = vld [vmem:[%s212 + $0x8] sm:$0xff]
      %v234 = vld [vmem:[%s212 + $0x10] sm:$0xff]
      %v235 = vld [vmem:[%s212 + $0x18] sm:$0xff]
      %v236 = vld [vmem:[%s212 + $0x20] sm:$0xff]
      %v237 = vld [vmem:[%s212 + $0x28] sm:$0xff]
      %v238 = vld [vmem:[%s212 + $0x30] sm:$0xff]
      %v239 = vld [vmem:[%s212 + $0x38] sm:$0xff]
      %v240 = vld [vmem:[%s212 + $0x40] sm:$0xff]
      %v241 = vld [vmem:[%s212 + $0x48] sm:$0xff]
      %v242 = vld [vmem:[%s212 + $0x50] sm:$0xff]
      %v243 = vld [vmem:[%s212 + $0x58] sm:$0xff]
      %v244 = vld [vmem:[%s212 + $0x60] sm:$0xff]
      %v245 = vld [vmem:[%s212 + $0x68] sm:$0xff]
      %v246 = vld [vmem:[%s212 + $0x70] sm:$0xff]
      %v247 = vld [vmem:[%s212 + $0x78] sm:$0xff]
      %v248 = vld [vmem:[%s212 + $0x80] sm:$0xff]
      %v249 = vld [vmem:[%s212 + $0x88] sm:$0xff]
      %v250 = vld [vmem:[%s212 + $0x90] sm:$0xff]
      %v251 = vld [vmem:[%s212 + $0x98] sm:$0xff]
      %v252 = vld [vmem:[%s212 + $0xa0] sm:$0xff]
      %v253 = vld [vmem:[%s212 + $0xa8] sm:$0xff]
      %v254 = vld [vmem:[%s212 + $0xb0] sm:$0xff]
      %v255 = vld [vmem:[%s212 + $0xb8] sm:$0xff]
      %v256 = vld [vmem:[%s212 + $0xc0] sm:$0xff]
      %v257 = vld [vmem:[%s212 + $0xc8] sm:$0xff]
      %v258 = vld [vmem:[%s212 + $0xd0] sm:$0xff]
      %v259 = vld [vmem:[%s212 + $0xd8] sm:$0xff]
      %v260 = vld [vmem:[%s212 + $0xe0] sm:$0xff]
      %v261 = vld [vmem:[%s212 + $0xe8] sm:$0xff]
      %v262 = vld [vmem:[%s212 + $0xf0] sm:$0xff]
      %v263 = vld [vmem:[%s212 + $0xf8] sm:$0xff]
      %v264 = vld [vmem:[%s212 + $0x100] sm:$0xff]
      %v265 = vld [vmem:[%s212 + $0x108] sm:$0xff]
      %v266 = vld [vmem:[%s212 + $0x110] sm:$0xff]
      %v267 = vld [vmem:[%s212 + $0x118] sm:$0xff]
      %v268 = vld [vmem:[%s212 + $0x120] sm:$0xff]
      %v269 = vld [vmem:[%s212 + $0x128] sm:$0xff]
      %v270 = vld [vmem:[%s212 + $0x130] sm:$0xff]
      %v271 = vld [vmem:[%s212 + $0x138] sm:$0xff]
      %v272 = vld [vmem:[%s212 + $0x140] sm:$0xff]
      %v273 = vld [vmem:[%s212 + $0x148] sm:$0xff]
      %v274 = vld [vmem:[%s212 + $0x150] sm:$0xff]
      %v275 = vld [vmem:[%s212 + $0x158] sm:$0xff]
      %v276 = vld [vmem:[%s212 + $0x160] sm:$0xff]
      %v277 = vld [vmem:[%s212 + $0x168] sm:$0xff]
      %v278 = vld [vmem:[%s212 + $0x170] sm:$0xff]
      %v279 = vld [vmem:[%s212 + $0x178] sm:$0xff]
      %v280 = vld [vmem:[%s212 + $0x180] sm:$0xff]
      %v281 = vld [vmem:[%s212 + $0x188] sm:$0xff]
      %v282 = vld [vmem:[%s212 + $0x190] sm:$0xff]
      %v283 = vld [vmem:[%s212 + $0x198] sm:$0xff]
      %v284 = vld [vmem:[%s212 + $0x1a0] sm:$0xff]
      %v285 = vld [vmem:[%s212 + $0x1a8] sm:$0xff]
      %v286 = vld [vmem:[%s212 + $0x1b0] sm:$0xff]
      %v287 = vld [vmem:[%s212 + $0x1b8] sm:$0xff]
      %v288 = vld [vmem:[%s212 + $0x1c0] sm:$0xff]
      %v289 = vld [vmem:[%s212 + $0x1c8] sm:$0xff]
      %v290 = vld [vmem:[%s212 + $0x1d0] sm:$0xff]
      %v291 = vld [vmem:[%s212 + $0x1d8] sm:$0xff]
      %v292 = vld [vmem:[%s212 + $0x1e0] sm:$0xff]
      %v293 = vld [vmem:[%s212 + $0x1e8] sm:$0xff]
      %v294 = vld [vmem:[%s212 + $0x1f0] sm:$0xff]
      %v295 = vld [vmem:[%s212 + $0x1f8] sm:$0xff]
      %v296 = vld [vmem:[%s217] sm:$0xf]
      %v297 = vld [vmem:[%s217 + $0x4] sm:$0xf]
      %v298 = vld [vmem:[%s217 + $0x8] sm:$0xf]
      %v299 = vld [vmem:[%s217 + $0xc] sm:$0xf]
      %v300 = vld [vmem:[%s217 + $0x10] sm:$0xf]
      %v301 = vld [vmem:[%s217 + $0x14] sm:$0xf]
      %v302 = vld [vmem:[%s217 + $0x18] sm:$0xf]
      %v303 = vld [vmem:[%s217 + $0x1c] sm:$0xf]
      %v304 = vld [vmem:[%s217 + $0x20] sm:$0xf]
      %v305 = vld [vmem:[%s217 + $0x24] sm:$0xf]
      %v306 = vld [vmem:[%s217 + $0x28] sm:$0xf]
      %v307 = vld [vmem:[%s217 + $0x2c] sm:$0xf]
      %v308 = vld [vmem:[%s217 + $0x30] sm:$0xf]
      %v309 = vld [vmem:[%s217 + $0x34] sm:$0xf]
      %v310 = vld [vmem:[%s217 + $0x38] sm:$0xf]
      %v311 = vld [vmem:[%s217 + $0x3c] sm:$0xf]
      %v312 = vld [vmem:[%s217 + $0x40] sm:$0xf]
      %v313 = vld [vmem:[%s217 + $0x44] sm:$0xf]
      %v314 = vld [vmem:[%s217 + $0x48] sm:$0x3]
      %v315 = vld [vmem:[%s221] sm:$0x1]
      %v316 = vlaneseq
      %v317 = vshrl.u32 %v316, 7
      %v318 = vsub.s32 0, %v317
      %v319 = vrot.slane %v315, %v318
      %v384 = vunpack.c.l.b16 %v232
      %v385 = vunpack.c.h.b16 %v232
      %v386 = vunpack.c.l.b16 %v233
      %v387 = vunpack.c.h.b16 %v233
      %v388 = vunpack.c.l.b16 %v234
      %v389 = vunpack.c.h.b16 %v234
      %v390 = vunpack.c.l.b16 %v235
      %v391 = vunpack.c.h.b16 %v235
      %v392 = vunpack.c.l.b16 %v236
      %v393 = vunpack.c.h.b16 %v236
      %v394 = vunpack.c.l.b16 %v237
      %v395 = vunpack.c.h.b16 %v237
      %v396 = vunpack.c.l.b16 %v238
      %v397 = vunpack.c.h.b16 %v238
      %v398 = vunpack.c.l.b16 %v239
      %v399 = vunpack.c.h.b16 %v239
      %v400 = vunpack.c.l.b16 %v240
      %v401 = vunpack.c.h.b16 %v240
      %v402 = vunpack.c.l.b16 %v241
      %v403 = vunpack.c.h.b16 %v241
      %v404 = vunpack.c.l.b16 %v242
      %v405 = vunpack.c.h.b16 %v242
      %v406 = vunpack.c.l.b16 %v243
      %v407 = vunpack.c.h.b16 %v243
      %v408 = vunpack.c.l.b16 %v244
      %v409 = vunpack.c.h.b16 %v244
      %v410 = vunpack.c.l.b16 %v245
      %v411 = vunpack.c.h.b16 %v245
      %v412 = vunpack.c.l.b16 %v246
      %v413 = vunpack.c.h.b16 %v246
      %v414 = vunpack.c.l.b16 %v247
      %v415 = vunpack.c.h.b16 %v247
      %v416 = vunpack.c.l.b16 %v248
      %v417 = vunpack.c.h.b16 %v248
      %v418 = vunpack.c.l.b16 %v249
      %v419 = vunpack.c.h.b16 %v249
      %v420 = vunpack.c.l.b16 %v250
      %v421 = vunpack.c.h.b16 %v250
      %v422 = vunpack.c.l.b16 %v251
      %v423 = vunpack.c.h.b16 %v251
      %v424 = vunpack.c.l.b16 %v252
      %v425 = vunpack.c.h.b16 %v252
      %v426 = vunpack.c.l.b16 %v253
      %v427 = vunpack.c.h.b16 %v253
      %v428 = vunpack.c.l.b16 %v254
      %v429 = vunpack.c.h.b16 %v254
      %v430 = vunpack.c.l.b16 %v255
      %v431 = vunpack.c.h.b16 %v255
      %v432 = vunpack.c.l.b16 %v256
      %v433 = vunpack.c.h.b16 %v256
      %v434 = vunpack.c.l.b16 %v257
      %v435 = vunpack.c.h.b16 %v257
      %v436 = vunpack.c.l.b16 %v258
      %v437 = vunpack.c.h.b16 %v258
      %v438 = vunpack.c.l.b16 %v259
      %v439 = vunpack.c.h.b16 %v259
      %v440 = vunpack.c.l.b16 %v260
      %v441 = vunpack.c.h.b16 %v260
      %v442 = vunpack.c.l.b16 %v261
      %v443 = vunpack.c.h.b16 %v261
      %v444 = vunpack.c.l.b16 %v262
      %v445 = vunpack.c.h.b16 %v262
      %v446 = vunpack.c.l.b16 %v263
      %v447 = vunpack.c.h.b16 %v263
      %v448 = vunpack.c.l.b16 %v264
      %v449 = vunpack.c.h.b16 %v264
      %v450 = vunpack.c.l.b16 %v265
      %v451 = vunpack.c.h.b16 %v265
      %v452 = vunpack.c.l.b16 %v266
      %v453 = vunpack.c.h.b16 %v266
      %v454 = vunpack.c.l.b16 %v267
      %v455 = vunpack.c.h.b16 %v267
      %v456 = vunpack.c.l.b16 %v268
      %v457 = vunpack.c.h.b16 %v268
      %v458 = vunpack.c.l.b16 %v269
      %v459 = vunpack.c.h.b16 %v269
      %v460 = vunpack.c.l.b16 %v270
      %v461 = vunpack.c.h.b16 %v270
      %v462 = vunpack.c.l.b16 %v271
      %v463 = vunpack.c.h.b16 %v271
      %v464 = vunpack.c.l.b16 %v272
      %v465 = vunpack.c.h.b16 %v272
      %v466 = vunpack.c.l.b16 %v273
      %v467 = vunpack.c.h.b16 %v273
      %v468 = vunpack.c.l.b16 %v274
      %v469 = vunpack.c.h.b16 %v274
      %v470 = vunpack.c.l.b16 %v275
      %v471 = vunpack.c.h.b16 %v275
      %v472 = vunpack.c.l.b16 %v276
      %v473 = vunpack.c.h.b16 %v276
      %v474 = vunpack.c.l.b16 %v277
      %v475 = vunpack.c.h.b16 %v277
      %v476 = vunpack.c.l.b16 %v278
      %v477 = vunpack.c.h.b16 %v278
      %v478 = vunpack.c.l.b16 %v279
      %v479 = vunpack.c.h.b16 %v279
      %v480 = vunpack.c.l.b16 %v280
      %v481 = vunpack.c.h.b16 %v280
      %v482 = vunpack.c.l.b16 %v281
      %v483 = vunpack.c.h.b16 %v281
      %v484 = vunpack.c.l.b16 %v282
      %v485 = vunpack.c.h.b16 %v282
      %v486 = vunpack.c.l.b16 %v283
      %v487 = vunpack.c.h.b16 %v283
      %v488 = vunpack.c.l.b16 %v284
      %v489 = vunpack.c.h.b16 %v284
      %v490 = vunpack.c.l.b16 %v285
      %v491 = vunpack.c.h.b16 %v285
      %v492 = vunpack.c.l.b16 %v286
      %v493 = vunpack.c.h.b16 %v286
      %v494 = vunpack.c.l.b16 %v287
      %v495 = vunpack.c.h.b16 %v287
      %v496 = vunpack.c.l.b16 %v288
      %v497 = vunpack.c.h.b16 %v288
      %v498 = vunpack.c.l.b16 %v289
      %v499 = vunpack.c.h.b16 %v289
      %v500 = vunpack.c.l.b16 %v290
      %v501 = vunpack.c.h.b16 %v290
      %v502 = vunpack.c.l.b16 %v291
      %v503 = vunpack.c.h.b16 %v291
      %v504 = vunpack.c.l.b16 %v292
      %v505 = vunpack.c.h.b16 %v292
      %v506 = vunpack.c.l.b16 %v293
      %v507 = vunpack.c.h.b16 %v293
      %v508 = vunpack.c.l.b16 %v294
      %v509 = vunpack.c.h.b16 %v294
      %v510 = vunpack.c.l.b16 %v295
      %v511 = vunpack.c.h.b16 %v295
      %v512 = vpack.c.b16 %v386, %v384
      %v513 = vpack.c.b16 %v387, %v385
      %v514 = vpack.c.b16 %v390, %v388
      %v515 = vpack.c.b16 %v391, %v389
      %v516 = vpack.c.b16 %v394, %v392
      %v517 = vpack.c.b16 %v395, %v393
      %v518 = vpack.c.b16 %v398, %v396
      %v519 = vpack.c.b16 %v399, %v397
      %v520 = vpack.c.b16 %v402, %v400
      %v521 = vpack.c.b16 %v403, %v401
      %v522 = vpack.c.b16 %v406, %v404
      %v523 = vpack.c.b16 %v407, %v405
      %v524 = vpack.c.b16 %v410, %v408
      %v525 = vpack.c.b16 %v411, %v409
      %v526 = vpack.c.b16 %v414, %v412
      %v527 = vpack.c.b16 %v415, %v413
      %v528 = vpack.c.b16 %v418, %v416
      %v529 = vpack.c.b16 %v419, %v417
      %v530 = vpack.c.b16 %v422, %v420
      %v531 = vpack.c.b16 %v423, %v421
      %v532 = vpack.c.b16 %v426, %v424
      %v533 = vpack.c.b16 %v427, %v425
      %v534 = vpack.c.b16 %v430, %v428
      %v535 = vpack.c.b16 %v431, %v429
      %v536 = vpack.c.b16 %v434, %v432
      %v537 = vpack.c.b16 %v435, %v433
      %v538 = vpack.c.b16 %v438, %v436
      %v539 = vpack.c.b16 %v439, %v437
      %v540 = vpack.c.b16 %v442, %v440
      %v541 = vpack.c.b16 %v443, %v441
      %v542 = vpack.c.b16 %v446, %v444
      %v543 = vpack.c.b16 %v447, %v445
      %v544 = vpack.c.b16 %v450, %v448
      %v545 = vpack.c.b16 %v451, %v449
      %v546 = vpack.c.b16 %v454, %v452
      %v547 = vpack.c.b16 %v455, %v453
      %v548 = vpack.c.b16 %v458, %v456
      %v549 = vpack.c.b16 %v459, %v457
      %v550 = vpack.c.b16 %v462, %v460
      %v551 = vpack.c.b16 %v463, %v461
      %v552 = vpack.c.b16 %v466, %v464
      %v553 = vpack.c.b16 %v467, %v465
      %v554 = vpack.c.b16 %v470, %v468
      %v555 = vpack.c.b16 %v471, %v469
      %v556 = vpack.c.b16 %v474, %v472
      %v557 = vpack.c.b16 %v475, %v473
      %v558 = vpack.c.b16 %v478, %v476
      %v559 = vpack.c.b16 %v479, %v477
      %v560 = vpack.c.b16 %v482, %v480
      %v561 = vpack.c.b16 %v483, %v481
      %v562 = vpack.c.b16 %v486, %v484
      %v563 = vpack.c.b16 %v487, %v485
      %v564 = vpack.c.b16 %v490, %v488
      %v565 = vpack.c.b16 %v491, %v489
      %v566 = vpack.c.b16 %v494, %v492
      %v567 = vpack.c.b16 %v495, %v493
      %v568 = vpack.c.b16 %v498, %v496
      %v569 = vpack.c.b16 %v499, %v497
      %v570 = vpack.c.b16 %v502, %v500
      %v571 = vpack.c.b16 %v503, %v501
      %v572 = vpack.c.b16 %v506, %v504
      %v573 = vpack.c.b16 %v507, %v505
      %v574 = vpack.c.b16 %v510, %v508
      %v575 = vpack.c.b16 %v511, %v509
      %v627 = vunpack.c.l.b16 %v296
      %v628 = vunpack.c.l.b16 %v297
      %v629 = vunpack.c.l.b16 %v298
      %v630 = vunpack.c.l.b16 %v299
      %v631 = vunpack.c.l.b16 %v300
      %v632 = vunpack.c.l.b16 %v301
      %v633 = vunpack.c.l.b16 %v302
      %v634 = vunpack.c.l.b16 %v303
      %v635 = vunpack.c.l.b16 %v304
      %v636 = vunpack.c.l.b16 %v305
      %v637 = vunpack.c.l.b16 %v306
      %v638 = vunpack.c.l.b16 %v307
      %v639 = vunpack.c.l.b16 %v308
      %v640 = vunpack.c.l.b16 %v309
      %v641 = vunpack.c.l.b16 %v310
      %v642 = vunpack.c.l.b16 %v311
      %v643 = vunpack.c.l.b16 %v312
      %v644 = vunpack.c.l.b16 %v313
      %v645 = vunpack.c.l.b16 %v314
      %v646 = vpack.c.b16 %v628, %v627
      %v647 = vpack.c.b16 %v630, %v629
      %v648 = vpack.c.b16 %v632, %v631
      %v649 = vpack.c.b16 %v634, %v633
      %v650 = vpack.c.b16 %v636, %v635
      %v651 = vpack.c.b16 %v638, %v637
      %v652 = vpack.c.b16 %v640, %v639
      %v653 = vpack.c.b16 %v642, %v641
      %v654 = vpack.c.b16 %v644, %v643
      %v655 = vpack.c.b16 %v645, %v645
      %vm665 = vcmask 154624
      %v667 = vsel %vm665, %v513, 0
      %v670 = vsel %vm665, %v515, 0
      %v673 = vsel %vm665, %v517, 0
      %v676 = vsel %vm665, %v519, 0
      %v679 = vsel %vm665, %v521, 0
      %v682 = vsel %vm665, %v523, 0
      %v685 = vsel %vm665, %v525, 0
      %v688 = vsel %vm665, %v527, 0
      %v691 = vsel %vm665, %v529, 0
      %v694 = vsel %vm665, %v531, 0
      %v697 = vsel %vm665, %v533, 0
      %v700 = vsel %vm665, %v535, 0
      %v703 = vsel %vm665, %v537, 0
      %v706 = vsel %vm665, %v539, 0
      %v709 = vsel %vm665, %v541, 0
      %v712 = vsel %vm665, %v543, 0
      %v715 = vsel %vm665, %v545, 0
      %v718 = vsel %vm665, %v547, 0
      %v721 = vsel %vm665, %v549, 0
      %v724 = vsel %vm665, %v551, 0
      %v727 = vsel %vm665, %v553, 0
      %v730 = vsel %vm665, %v555, 0
      %v733 = vsel %vm665, %v557, 0
      %v736 = vsel %vm665, %v559, 0
      %v739 = vsel %vm665, %v561, 0
      %v742 = vsel %vm665, %v563, 0
      %v745 = vsel %vm665, %v565, 0
      %v748 = vsel %vm665, %v567, 0
      %v751 = vsel %vm665, %v569, 0
      %v754 = vsel %vm665, %v571, 0
      %v757 = vsel %vm665, %v573, 0
      %v760 = vsel %vm665, %v575, 0
      %vm762 = vcmask 1040384
      %vm763 = vcmask 1041408
      %v764 = vsel %vm762, 4294967295, 65535
      %v765 = vsel %vm763, %v764, 0
      %v767 = vand.u32 %v655, %v765
      %769 = vmatprep.subr.bf16.mxu0 0
      %770 = vmatpush1.bf16.msra.mxu0 %v653
      %771 = vmatprep.subr.bf16.mxu0 0
      %772 = vmatpush1.bf16.msra.mxu0 %v652
      %773 = vmatprep.subr.bf16.mxu0 0
      %774 = vmatpush1.bf16.msra.mxu0 %v651
      %775 = vmatprep.subr.bf16.mxu0 0
      %776 = vmatpush1.bf16.msra.mxu0 %v650
      %777 = vmatprep.subr.bf16.mxu0 0
      %778 = vmatpush1.bf16.msra.mxu0 %v649
      %779 = vmatprep.subr.bf16.mxu0 0
      %780 = vmatpush1.bf16.msra.mxu0 %v648
      %781 = vmatprep.subr.bf16.mxu0 0
      %782 = vmatpush1.bf16.msra.mxu0 %v647
      %783 = vmatprep.subr.bf16.mxu0 0
      %784 = vmatpush1.bf16.msra.mxu0 %v646
      %785 = vmatprep.subr.bf16.mxu0 0
      %786 = vmatpush2.bf16.msra.mxu0 0
      %787 = vmatprep.subr.bf16.mxu0 0
      %788 = vmatpush2.bf16.msra.mxu0 0
      %789 = vmatprep.subr.bf16.mxu0 0
      %790 = vmatpush2.bf16.msra.mxu0 0
      %791 = vmatprep.subr.bf16.mxu0 0
      %792 = vmatpush2.bf16.msra.mxu0 0
      %793 = vmatprep.subr.bf16.mxu0 0
      %794 = vmatpush2.bf16.msra.mxu0 0
      %795 = vmatprep.subr.bf16.mxu0 0
      %796 = vmatpush2.bf16.msra.mxu0 0
      %797 = vmatprep.subr.bf16.mxu0 0
      %798 = vmatpush2.bf16.msra.mxu0 %v767
      %799 = vmatprep.subr.bf16.mxu0 0
      %800 = vmatpush2.bf16.msra.mxu0 %v654
      %801 = vmatprep.mubr.bf16.mxu0 %v667
      %802 = vmatmul.mubr.bf16.gmra.mxu0 %v512
      %v803 = vpop.f32.mrf.mxu0
      %v804 = vadd.f32 %v319, %v803
      %v805 = vpop.f32.mrf.mxu0
      %v806 = vpop.f32.mrf.mxu0
      %v807 = vadd.f32 %v319, %v806
      %v808 = vpop.f32.mrf.mxu0
      %809 = vmatprep.mubr.bf16.mxu0 %v670
      %810 = vmatmul.mubr.bf16.gmra.mxu0 %v514
      %v811 = vpop.f32.mrf.mxu0
      %v812 = vadd.f32 %v319, %v811
      %v813 = vpop.f32.mrf.mxu0
      %v814 = vpop.f32.mrf.mxu0
      %v815 = vadd.f32 %v319, %v814
      %v816 = vpop.f32.mrf.mxu0
      %817 = vmatprep.mubr.bf16.mxu0 %v673
      %818 = vmatmul.mubr.bf16.gmra.mxu0 %v516
      %v819 = vpop.f32.mrf.mxu0
      %v820 = vadd.f32 %v319, %v819
      %v821 = vpop.f32.mrf.mxu0
      %v822 = vpop.f32.mrf.mxu0
      %v823 = vadd.f32 %v319, %v822
      %v824 = vpop.f32.mrf.mxu0
      %825 = vmatprep.mubr.bf16.mxu0 %v676
      %826 = vmatmul.mubr.bf16.gmra.mxu0 %v518
      %v827 = vpop.f32.mrf.mxu0
      %v828 = vadd.f32 %v319, %v827
      %v829 = vpop.f32.mrf.mxu0
      %v830 = vpop.f32.mrf.mxu0
      %v831 = vadd.f32 %v319, %v830
      %v832 = vpop.f32.mrf.mxu0
      %833 = vmatprep.mubr.bf16.mxu0 %v679
      %834 = vmatmul.mubr.bf16.gmra.mxu0 %v520
      %v835 = vpop.f32.mrf.mxu0
      %v836 = vadd.f32 %v319, %v835
      %v837 = vpop.f32.mrf.mxu0
      %v838 = vpop.f32.mrf.mxu0
      %v839 = vadd.f32 %v319, %v838
      %v840 = vpop.f32.mrf.mxu0
      %841 = vmatprep.mubr.bf16.mxu0 %v682
      %842 = vmatmul.mubr.bf16.gmra.mxu0 %v522
      %v843 = vpop.f32.mrf.mxu0
      %v844 = vadd.f32 %v319, %v843
      %v845 = vpop.f32.mrf.mxu0
      %v846 = vpop.f32.mrf.mxu0
      %v847 = vadd.f32 %v319, %v846
      %v848 = vpop.f32.mrf.mxu0
      %849 = vmatprep.mubr.bf16.mxu0 %v685
      %850 = vmatmul.mubr.bf16.gmra.mxu0 %v524
      %v851 = vpop.f32.mrf.mxu0
      %v852 = vadd.f32 %v319, %v851
      %v853 = vpop.f32.mrf.mxu0
      %v854 = vpop.f32.mrf.mxu0
      %v855 = vadd.f32 %v319, %v854
      %v856 = vpop.f32.mrf.mxu0
      %857 = vmatprep.mubr.bf16.mxu0 %v688
      %858 = vmatmul.mubr.bf16.gmra.mxu0 %v526
      %v859 = vpop.f32.mrf.mxu0
      %v860 = vadd.f32 %v319, %v859
      %v861 = vpop.f32.mrf.mxu0
      %v862 = vpop.f32.mrf.mxu0
      %v863 = vadd.f32 %v319, %v862
      %v864 = vpop.f32.mrf.mxu0
      %865 = vmatprep.mubr.bf16.mxu0 %v691
      %866 = vmatmul.mubr.bf16.gmra.mxu0 %v528
      %v867 = vpop.f32.mrf.mxu0
      %v868 = vadd.f32 %v319, %v867
      %v869 = vpop.f32.mrf.mxu0
      %v870 = vpop.f32.mrf.mxu0
      %v871 = vadd.f32 %v319, %v870
      %v872 = vpop.f32.mrf.mxu0
      %873 = vmatprep.mubr.bf16.mxu0 %v694
      %874 = vmatmul.mubr.bf16.gmra.mxu0 %v530
      %v875 = vpop.f32.mrf.mxu0
      %v876 = vadd.f32 %v319, %v875
      %v877 = vpop.f32.mrf.mxu0
      %v878 = vpop.f32.mrf.mxu0
      %v879 = vadd.f32 %v319, %v878
      %v880 = vpop.f32.mrf.mxu0
      %881 = vmatprep.mubr.bf16.mxu0 %v697
      %882 = vmatmul.mubr.bf16.gmra.mxu0 %v532
      %v883 = vpop.f32.mrf.mxu0
      %v884 = vadd.f32 %v319, %v883
      %v885 = vpop.f32.mrf.mxu0
      %v886 = vpop.f32.mrf.mxu0
      %v887 = vadd.f32 %v319, %v886
      %v888 = vpop.f32.mrf.mxu0
      %889 = vmatprep.mubr.bf16.mxu0 %v700
      %890 = vmatmul.mubr.bf16.gmra.mxu0 %v534
      %v891 = vpop.f32.mrf.mxu0
      %v892 = vadd.f32 %v319, %v891
      %v893 = vpop.f32.mrf.mxu0
      %v894 = vpop.f32.mrf.mxu0
      %v895 = vadd.f32 %v319, %v894
      %v896 = vpop.f32.mrf.mxu0
      %897 = vmatprep.mubr.bf16.mxu0 %v703
      %898 = vmatmul.mubr.bf16.gmra.mxu0 %v536
      %v899 = vpop.f32.mrf.mxu0
      %v900 = vadd.f32 %v319, %v899
      %v901 = vpop.f32.mrf.mxu0
      %v902 = vpop.f32.mrf.mxu0
      %v903 = vadd.f32 %v319, %v902
      %v904 = vpop.f32.mrf.mxu0
      %905 = vmatprep.mubr.bf16.mxu0 %v706
      %906 = vmatmul.mubr.bf16.gmra.mxu0 %v538
      %v907 = vpop.f32.mrf.mxu0
      %v908 = vadd.f32 %v319, %v907
      %v909 = vpop.f32.mrf.mxu0
      %v910 = vpop.f32.mrf.mxu0
      %v911 = vadd.f32 %v319, %v910
      %v912 = vpop.f32.mrf.mxu0
      %913 = vmatprep.mubr.bf16.mxu0 %v709
      %914 = vmatmul.mubr.bf16.gmra.mxu0 %v540
      %v915 = vpop.f32.mrf.mxu0
      %v916 = vadd.f32 %v319, %v915
      %v917 = vpop.f32.mrf.mxu0
      %v918 = vpop.f32.mrf.mxu0
      %v919 = vadd.f32 %v319, %v918
      %v920 = vpop.f32.mrf.mxu0
      %921 = vmatprep.mubr.bf16.mxu0 %v712
      %922 = vmatmul.mubr.bf16.gmra.mxu0 %v542
      %v923 = vpop.f32.mrf.mxu0
      %v924 = vadd.f32 %v319, %v923
      %v925 = vpop.f32.mrf.mxu0
      %v926 = vpop.f32.mrf.mxu0
      %v927 = vadd.f32 %v319, %v926
      %v928 = vpop.f32.mrf.mxu0
      %929 = vmatprep.mubr.bf16.mxu0 %v715
      %930 = vmatmul.mubr.bf16.gmra.mxu0 %v544
      %v931 = vpop.f32.mrf.mxu0
      %v932 = vadd.f32 %v319, %v931
      %v933 = vpop.f32.mrf.mxu0
      %v934 = vpop.f32.mrf.mxu0
      %v935 = vadd.f32 %v319, %v934
      %v936 = vpop.f32.mrf.mxu0
      %937 = vmatprep.mubr.bf16.mxu0 %v718
      %938 = vmatmul.mubr.bf16.gmra.mxu0 %v546
      %v939 = vpop.f32.mrf.mxu0
      %v940 = vadd.f32 %v319, %v939
      %v941 = vpop.f32.mrf.mxu0
      %v942 = vpop.f32.mrf.mxu0
      %v943 = vadd.f32 %v319, %v942
      %v944 = vpop.f32.mrf.mxu0
      %945 = vmatprep.mubr.bf16.mxu0 %v721
      %946 = vmatmul.mubr.bf16.gmra.mxu0 %v548
      %v947 = vpop.f32.mrf.mxu0
      %v948 = vadd.f32 %v319, %v947
      %v949 = vpop.f32.mrf.mxu0
      %v950 = vpop.f32.mrf.mxu0
      %v951 = vadd.f32 %v319, %v950
      %v952 = vpop.f32.mrf.mxu0
      %953 = vmatprep.mubr.bf16.mxu0 %v724
      %954 = vmatmul.mubr.bf16.gmra.mxu0 %v550
      %v955 = vpop.f32.mrf.mxu0
      %v956 = vadd.f32 %v319, %v955
      %v957 = vpop.f32.mrf.mxu0
      %v958 = vpop.f32.mrf.mxu0
      %v959 = vadd.f32 %v319, %v958
      %v960 = vpop.f32.mrf.mxu0
      %961 = vmatprep.mubr.bf16.mxu0 %v727
      %962 = vmatmul.mubr.bf16.gmra.mxu0 %v552
      %v963 = vpop.f32.mrf.mxu0
      %v964 = vadd.f32 %v319, %v963
      %v965 = vpop.f32.mrf.mxu0
      %v966 = vpop.f32.mrf.mxu0
      %v967 = vadd.f32 %v319, %v966
      %v968 = vpop.f32.mrf.mxu0
      %969 = vmatprep.mubr.bf16.mxu0 %v730
      %970 = vmatmul.mubr.bf16.gmra.mxu0 %v554
      %v971 = vpop.f32.mrf.mxu0
      %v972 = vadd.f32 %v319, %v971
      %v973 = vpop.f32.mrf.mxu0
      %v974 = vpop.f32.mrf.mxu0
      %v975 = vadd.f32 %v319, %v974
      %v976 = vpop.f32.mrf.mxu0
      %977 = vmatprep.mubr.bf16.mxu0 %v733
      %978 = vmatmul.mubr.bf16.gmra.mxu0 %v556
      %v979 = vpop.f32.mrf.mxu0
      %v980 = vadd.f32 %v319, %v979
      %v981 = vpop.f32.mrf.mxu0
      %v982 = vpop.f32.mrf.mxu0
      %v983 = vadd.f32 %v319, %v982
      %v984 = vpop.f32.mrf.mxu0
      %985 = vmatprep.mubr.bf16.mxu0 %v736
      %986 = vmatmul.mubr.bf16.gmra.mxu0 %v558
      %v987 = vpop.f32.mrf.mxu0
      %v988 = vadd.f32 %v319, %v987
      %v989 = vpop.f32.mrf.mxu0
      %v990 = vpop.f32.mrf.mxu0
      %v991 = vadd.f32 %v319, %v990
      %v992 = vpop.f32.mrf.mxu0
      %993 = vmatprep.mubr.bf16.mxu0 %v739
      %994 = vmatmul.mubr.bf16.gmra.mxu0 %v560
      %v995 = vpop.f32.mrf.mxu0
      %v996 = vadd.f32 %v319, %v995
      %v997 = vpop.f32.mrf.mxu0
      %v998 = vpop.f32.mrf.mxu0
      %v999 = vadd.f32 %v319, %v998
      %v1000 = vpop.f32.mrf.mxu0
      %1001 = vmatprep.mubr.bf16.mxu0 %v742
      %1002 = vmatmul.mubr.bf16.gmra.mxu0 %v562
      %v1003 = vpop.f32.mrf.mxu0
      %v1004 = vadd.f32 %v319, %v1003
      %v1005 = vpop.f32.mrf.mxu0
      %v1006 = vpop.f32.mrf.mxu0
      %v1007 = vadd.f32 %v319, %v1006
      %v1008 = vpop.f32.mrf.mxu0
      %1009 = vmatprep.mubr.bf16.mxu0 %v745
      %1010 = vmatmul.mubr.bf16.gmra.mxu0 %v564
      %v1011 = vpop.f32.mrf.mxu0
      %v1012 = vadd.f32 %v319, %v1011
      %v1013 = vpop.f32.mrf.mxu0
      %v1014 = vpop.f32.mrf.mxu0
      %v1015 = vadd.f32 %v319, %v1014
      %v1016 = vpop.f32.mrf.mxu0
      %1017 = vmatprep.mubr.bf16.mxu0 %v748
      %1018 = vmatmul.mubr.bf16.gmra.mxu0 %v566
      %v1019 = vpop.f32.mrf.mxu0
      %v1020 = vadd.f32 %v319, %v1019
      %v1021 = vpop.f32.mrf.mxu0
      %v1022 = vpop.f32.mrf.mxu0
      %v1023 = vadd.f32 %v319, %v1022
      %v1024 = vpop.f32.mrf.mxu0
      %1025 = vmatprep.mubr.bf16.mxu0 %v751
      %1026 = vmatmul.mubr.bf16.gmra.mxu0 %v568
      %v1027 = vpop.f32.mrf.mxu0
      %v1028 = vadd.f32 %v319, %v1027
      %v1029 = vpop.f32.mrf.mxu0
      %v1030 = vpop.f32.mrf.mxu0
      %v1031 = vadd.f32 %v319, %v1030
      %v1032 = vpop.f32.mrf.mxu0
      %1033 = vmatprep.mubr.bf16.mxu0 %v754
      %1034 = vmatmul.mubr.bf16.gmra.mxu0 %v570
      %v1035 = vpop.f32.mrf.mxu0
      %v1036 = vadd.f32 %v319, %v1035
      %v1037 = vpop.f32.mrf.mxu0
      %v1038 = vpop.f32.mrf.mxu0
      %v1039 = vadd.f32 %v319, %v1038
      %v1040 = vpop.f32.mrf.mxu0
      %1041 = vmatprep.mubr.bf16.mxu0 %v757
      %1042 = vmatmul.mubr.bf16.gmra.mxu0 %v572
      %v1043 = vpop.f32.mrf.mxu0
      %v1044 = vadd.f32 %v319, %v1043
      %v1045 = vpop.f32.mrf.mxu0
      %v1046 = vpop.f32.mrf.mxu0
      %v1047 = vadd.f32 %v319, %v1046
      %v1048 = vpop.f32.mrf.mxu0
      %1049 = vmatprep.mubr.bf16.mxu0 %v760
      %1050 = vmatmul.mubr.bf16.gmra.mxu0 %v574
      %v1051 = vpop.f32.mrf.mxu0
      %v1052 = vadd.f32 %v319, %v1051
      %v1053 = vpop.f32.mrf.mxu0
      %v1054 = vpop.f32.mrf.mxu0
      %v1055 = vadd.f32 %v319, %v1054
      %v1056 = vpop.f32.mrf.mxu0
      %1057 = vdwg.mxu0
      %v1058 = vmax.f32 %v804, 0.0
      %v1059 = vmax.f32 %v807, 0.0
      %v1060 = vmax.f32 %v812, 0.0
      %v1061 = vmax.f32 %v815, 0.0
      %v1062 = vmax.f32 %v820, 0.0
      %v1063 = vmax.f32 %v823, 0.0
      %v1064 = vmax.f32 %v828, 0.0
      %v1065 = vmax.f32 %v831, 0.0
      %v1066 = vmax.f32 %v836, 0.0
      %v1067 = vmax.f32 %v839, 0.0
      %v1068 = vmax.f32 %v844, 0.0
      %v1069 = vmax.f32 %v847, 0.0
      %v1070 = vmax.f32 %v852, 0.0
      %v1071 = vmax.f32 %v855, 0.0
      %v1072 = vmax.f32 %v860, 0.0
      %v1073 = vmax.f32 %v863, 0.0
      %v1074 = vmax.f32 %v868, 0.0
      %v1075 = vmax.f32 %v871, 0.0
      %v1076 = vmax.f32 %v876, 0.0
      %v1077 = vmax.f32 %v879, 0.0
      %v1078 = vmax.f32 %v884, 0.0
      %v1079 = vmax.f32 %v887, 0.0
      %v1080 = vmax.f32 %v892, 0.0
      %v1081 = vmax.f32 %v895, 0.0
      %v1082 = vmax.f32 %v900, 0.0
      %v1083 = vmax.f32 %v903, 0.0
      %v1084 = vmax.f32 %v908, 0.0
      %v1085 = vmax.f32 %v911, 0.0
      %v1086 = vmax.f32 %v916, 0.0
      %v1087 = vmax.f32 %v919, 0.0
      %v1088 = vmax.f32 %v924, 0.0
      %v1089 = vmax.f32 %v927, 0.0
      %v1090 = vmax.f32 %v932, 0.0
      %v1091 = vmax.f32 %v935, 0.0
      %v1092 = vmax.f32 %v940, 0.0
      %v1093 = vmax.f32 %v943, 0.0
      %v1094 = vmax.f32 %v948, 0.0
      %v1095 = vmax.f32 %v951, 0.0
      %v1096 = vmax.f32 %v956, 0.0
      %v1097 = vmax.f32 %v959, 0.0
      %v1098 = vmax.f32 %v964, 0.0
      %v1099 = vmax.f32 %v967, 0.0
      %v1100 = vmax.f32 %v972, 0.0
      %v1101 = vmax.f32 %v975, 0.0
      %v1102 = vmax.f32 %v980, 0.0
      %v1103 = vmax.f32 %v983, 0.0
      %v1104 = vmax.f32 %v988, 0.0
      %v1105 = vmax.f32 %v991, 0.0
      %v1106 = vmax.f32 %v996, 0.0
      %v1107 = vmax.f32 %v999, 0.0
      %v1108 = vmax.f32 %v1004, 0.0
      %v1109 = vmax.f32 %v1007, 0.0
      %v1110 = vmax.f32 %v1012, 0.0
      %v1111 = vmax.f32 %v1015, 0.0
      %v1112 = vmax.f32 %v1020, 0.0
      %v1113 = vmax.f32 %v1023, 0.0
      %v1114 = vmax.f32 %v1028, 0.0
      %v1115 = vmax.f32 %v1031, 0.0
      %v1116 = vmax.f32 %v1036, 0.0
      %v1117 = vmax.f32 %v1039, 0.0
      %v1118 = vmax.f32 %v1044, 0.0
      %v1119 = vmax.f32 %v1047, 0.0
      %v1120 = vmax.f32 %v1052, 0.0
      %v1121 = vmax.f32 %v1055, 0.0
      %v1122 = vpack.c.bf16 %v1059, %v1058
      %v1123 = vpack.c.bf16 %v1061, %v1060
      %v1124 = vpack.c.bf16 %v1063, %v1062
      %v1125 = vpack.c.bf16 %v1065, %v1064
      %v1126 = vpack.c.bf16 %v1067, %v1066
      %v1127 = vpack.c.bf16 %v1069, %v1068
      %v1128 = vpack.c.bf16 %v1071, %v1070
      %v1129 = vpack.c.bf16 %v1073, %v1072
      %v1130 = vpack.c.bf16 %v1075, %v1074
      %v1131 = vpack.c.bf16 %v1077, %v1076
      %v1132 = vpack.c.bf16 %v1079, %v1078
      %v1133 = vpack.c.bf16 %v1081, %v1080
      %v1134 = vpack.c.bf16 %v1083, %v1082
      %v1135 = vpack.c.bf16 %v1085, %v1084
      %v1136 = vpack.c.bf16 %v1087, %v1086
      %v1137 = vpack.c.bf16 %v1089, %v1088
      %v1138 = vpack.c.bf16 %v1091, %v1090
      %v1139 = vpack.c.bf16 %v1093, %v1092
      %v1140 = vpack.c.bf16 %v1095, %v1094
      %v1141 = vpack.c.bf16 %v1097, %v1096
      %v1142 = vpack.c.bf16 %v1099, %v1098
      %v1143 = vpack.c.bf16 %v1101, %v1100
      %v1144 = vpack.c.bf16 %v1103, %v1102
      %v1145 = vpack.c.bf16 %v1105, %v1104
      %v1146 = vpack.c.bf16 %v1107, %v1106
      %v1147 = vpack.c.bf16 %v1109, %v1108
      %v1148 = vpack.c.bf16 %v1111, %v1110
      %v1149 = vpack.c.bf16 %v1113, %v1112
      %v1150 = vpack.c.bf16 %v1115, %v1114
      %v1151 = vpack.c.bf16 %v1117, %v1116
      %v1152 = vpack.c.bf16 %v1119, %v1118
      %v1153 = vpack.c.bf16 %v1121, %v1120
      %v1186 = vunpack.c.l.b16 %v1122
      %v1187 = vunpack.c.h.b16 %v1122
      %v1188 = vunpack.c.l.b16 %v1123
      %v1189 = vunpack.c.h.b16 %v1123
      %v1190 = vunpack.c.l.b16 %v1124
      %v1191 = vunpack.c.h.b16 %v1124
      %v1192 = vunpack.c.l.b16 %v1125
      %v1193 = vunpack.c.h.b16 %v1125
      %v1194 = vunpack.c.l.b16 %v1126
      %v1195 = vunpack.c.h.b16 %v1126
      %v1196 = vunpack.c.l.b16 %v1127
      %v1197 = vunpack.c.h.b16 %v1127
      %v1198 = vunpack.c.l.b16 %v1128
      %v1199 = vunpack.c.h.b16 %v1128
      %v1200 = vunpack.c.l.b16 %v1129
      %v1201 = vunpack.c.h.b16 %v1129
      %v1202 = vunpack.c.l.b16 %v1130
      %v1203 = vunpack.c.h.b16 %v1130
      %v1204 = vunpack.c.l.b16 %v1131
      %v1205 = vunpack.c.h.b16 %v1131
      %v1206 = vunpack.c.l.b16 %v1132
      %v1207 = vunpack.c.h.b16 %v1132
      %v1208 = vunpack.c.l.b16 %v1133
      %v1209 = vunpack.c.h.b16 %v1133
      %v1210 = vunpack.c.l.b16 %v1134
      %v1211 = vunpack.c.h.b16 %v1134
      %v1212 = vunpack.c.l.b16 %v1135
      %v1213 = vunpack.c.h.b16 %v1135
      %v1214 = vunpack.c.l.b16 %v1136
      %v1215 = vunpack.c.h.b16 %v1136
      %v1216 = vunpack.c.l.b16 %v1137
      %v1217 = vunpack.c.h.b16 %v1137
      %v1218 = vunpack.c.l.b16 %v1138
      %v1219 = vunpack.c.h.b16 %v1138
      %v1220 = vunpack.c.l.b16 %v1139
      %v1221 = vunpack.c.h.b16 %v1139
      %v1222 = vunpack.c.l.b16 %v1140
      %v1223 = vunpack.c.h.b16 %v1140
      %v1224 = vunpack.c.l.b16 %v1141
      %v1225 = vunpack.c.h.b16 %v1141
      %v1226 = vunpack.c.l.b16 %v1142
      %v1227 = vunpack.c.h.b16 %v1142
      %v1228 = vunpack.c.l.b16 %v1143
      %v1229 = vunpack.c.h.b16 %v1143
      %v1230 = vunpack.c.l.b16 %v1144
      %v1231 = vunpack.c.h.b16 %v1144
      %v1232 = vunpack.c.l.b16 %v1145
      %v1233 = vunpack.c.h.b16 %v1145
      %v1234 = vunpack.c.l.b16 %v1146
      %v1235 = vunpack.c.h.b16 %v1146
      %v1236 = vunpack.c.l.b16 %v1147
      %v1237 = vunpack.c.h.b16 %v1147
      %v1238 = vunpack.c.l.b16 %v1148
      %v1239 = vunpack.c.h.b16 %v1148
      %v1240 = vunpack.c.l.b16 %v1149
      %v1241 = vunpack.c.h.b16 %v1149
      %v1242 = vunpack.c.l.b16 %v1150
      %v1243 = vunpack.c.h.b16 %v1150
      %v1244 = vunpack.c.l.b16 %v1151
      %v1245 = vunpack.c.h.b16 %v1151
      %v1246 = vunpack.c.l.b16 %v1152
      %v1247 = vunpack.c.h.b16 %v1152
      %v1248 = vunpack.c.l.b16 %v1153
      %v1249 = vunpack.c.h.b16 %v1153
      %v1250 = vpack.c.b16 %v1186, %v1186
      %v1251 = vpack.c.b16 %v1187, %v1187
      %v1252 = vpack.c.b16 %v1188, %v1188
      %v1253 = vpack.c.b16 %v1189, %v1189
      %v1254 = vpack.c.b16 %v1190, %v1190
      %v1255 = vpack.c.b16 %v1191, %v1191
      %v1256 = vpack.c.b16 %v1192, %v1192
      %v1257 = vpack.c.b16 %v1193, %v1193
      %v1258 = vpack.c.b16 %v1194, %v1194
      %v1259 = vpack.c.b16 %v1195, %v1195
      %v1260 = vpack.c.b16 %v1196, %v1196
      %v1261 = vpack.c.b16 %v1197, %v1197
      %v1262 = vpack.c.b16 %v1198, %v1198
      %v1263 = vpack.c.b16 %v1199, %v1199
      %v1264 = vpack.c.b16 %v1200, %v1200
      %v1265 = vpack.c.b16 %v1201, %v1201
      %v1266 = vpack.c.b16 %v1202, %v1202
      %v1267 = vpack.c.b16 %v1203, %v1203
      %v1268 = vpack.c.b16 %v1204, %v1204
      %v1269 = vpack.c.b16 %v1205, %v1205
      %v1270 = vpack.c.b16 %v1206, %v1206
      %v1271 = vpack.c.b16 %v1207, %v1207
      %v1272 = vpack.c.b16 %v1208, %v1208
      %v1273 = vpack.c.b16 %v1209, %v1209
      %v1274 = vpack.c.b16 %v1210, %v1210
      %v1275 = vpack.c.b16 %v1211, %v1211
      %v1276 = vpack.c.b16 %v1212, %v1212
      %v1277 = vpack.c.b16 %v1213, %v1213
      %v1278 = vpack.c.b16 %v1214, %v1214
      %v1279 = vpack.c.b16 %v1215, %v1215
      %v1280 = vpack.c.b16 %v1216, %v1216
      %v1281 = vpack.c.b16 %v1217, %v1217
      %v1282 = vpack.c.b16 %v1218, %v1218
      %v1283 = vpack.c.b16 %v1219, %v1219
      %v1284 = vpack.c.b16 %v1220, %v1220
      %v1285 = vpack.c.b16 %v1221, %v1221
      %v1286 = vpack.c.b16 %v1222, %v1222
      %v1287 = vpack.c.b16 %v1223, %v1223
      %v1288 = vpack.c.b16 %v1224, %v1224
      %v1289 = vpack.c.b16 %v1225, %v1225
      %v1290 = vpack.c.b16 %v1226, %v1226
      %v1291 = vpack.c.b16 %v1227, %v1227
      %v1292 = vpack.c.b16 %v1228, %v1228
      %v1293 = vpack.c.b16 %v1229, %v1229
      %v1294 = vpack.c.b16 %v1230, %v1230
      %v1295 = vpack.c.b16 %v1231, %v1231
      %v1296 = vpack.c.b16 %v1232, %v1232
      %v1297 = vpack.c.b16 %v1233, %v1233
      %v1298 = vpack.c.b16 %v1234, %v1234
      %v1299 = vpack.c.b16 %v1235, %v1235
      %v1300 = vpack.c.b16 %v1236, %v1236
      %v1301 = vpack.c.b16 %v1237, %v1237
      %v1302 = vpack.c.b16 %v1238, %v1238
      %v1303 = vpack.c.b16 %v1239, %v1239
      %v1304 = vpack.c.b16 %v1240, %v1240
      %v1305 = vpack.c.b16 %v1241, %v1241
      %v1306 = vpack.c.b16 %v1242, %v1242
      %v1307 = vpack.c.b16 %v1243, %v1243
      %v1308 = vpack.c.b16 %v1244, %v1244
      %v1309 = vpack.c.b16 %v1245, %v1245
      %v1310 = vpack.c.b16 %v1246, %v1246
      %v1311 = vpack.c.b16 %v1247, %v1247
      %v1312 = vpack.c.b16 %v1248, %v1248
      %v1313 = vpack.c.b16 %v1249, %v1249
      %vm1378 = vcmask 519168
      %1379 = vst.msk [vmem:[%s229] sm:$0xf] %vm1378, %v1250
      %1380 = vst.msk [vmem:[%s229 + $0x4] sm:$0xf] %vm1378, %v1251
      %1381 = vst.msk [vmem:[%s229 + $0x8] sm:$0xf] %vm1378, %v1252
      %1382 = vst.msk [vmem:[%s229 + $0xc] sm:$0xf] %vm1378, %v1253
      %1383 = vst.msk [vmem:[%s229 + $0x10] sm:$0xf] %vm1378, %v1254
      %1384 = vst.msk [vmem:[%s229 + $0x14] sm:$0xf] %vm1378, %v1255
      %1385 = vst.msk [vmem:[%s229 + $0x18] sm:$0xf] %vm1378, %v1256
      %1386 = vst.msk [vmem:[%s229 + $0x1c] sm:$0xf] %vm1378, %v1257
      %1387 = vst.msk [vmem:[%s229 + $0x20] sm:$0xf] %vm1378, %v1258
      %1388 = vst.msk [vmem:[%s229 + $0x24] sm:$0xf] %vm1378, %v1259
      %1389 = vst.msk [vmem:[%s229 + $0x28] sm:$0xf] %vm1378, %v1260
      %1390 = vst.msk [vmem:[%s229 + $0x2c] sm:$0xf] %vm1378, %v1261
      %1391 = vst.msk [vmem:[%s229 + $0x30] sm:$0xf] %vm1378, %v1262
      %1392 = vst.msk [vmem:[%s229 + $0x34] sm:$0xf] %vm1378, %v1263
      %1393 = vst.msk [vmem:[%s229 + $0x38] sm:$0xf] %vm1378, %v1264
      %1394 = vst.msk [vmem:[%s229 + $0x3c] sm:$0xf] %vm1378, %v1265
      %1395 = vst.msk [vmem:[%s229 + $0x40] sm:$0xf] %vm1378, %v1266
      %1396 = vst.msk [vmem:[%s229 + $0x44] sm:$0xf] %vm1378, %v1267
      %1397 = vst.msk [vmem:[%s229 + $0x48] sm:$0xf] %vm1378, %v1268
      %1398 = vst.msk [vmem:[%s229 + $0x4c] sm:$0xf] %vm1378, %v1269
      %1399 = vst.msk [vmem:[%s229 + $0x50] sm:$0xf] %vm1378, %v1270
      %1400 = vst.msk [vmem:[%s229 + $0x54] sm:$0xf] %vm1378, %v1271
      %1401 = vst.msk [vmem:[%s229 + $0x58] sm:$0xf] %vm1378, %v1272
      %1402 = vst.msk [vmem:[%s229 + $0x5c] sm:$0xf] %vm1378, %v1273
      %1403 = vst.msk [vmem:[%s229 + $0x60] sm:$0xf] %vm1378, %v1274
      %1404 = vst.msk [vmem:[%s229 + $0x64] sm:$0xf] %vm1378, %v1275
      %1405 = vst.msk [vmem:[%s229 + $0x68] sm:$0xf] %vm1378, %v1276
      %1406 = vst.msk [vmem:[%s229 + $0x6c] sm:$0xf] %vm1378, %v1277
      %1407 = vst.msk [vmem:[%s229 + $0x70] sm:$0xf] %vm1378, %v1278
      %1408 = vst.msk [vmem:[%s229 + $0x74] sm:$0xf] %vm1378, %v1279
      %1409 = vst.msk [vmem:[%s229 + $0x78] sm:$0xf] %vm1378, %v1280
      %1410 = vst.msk [vmem:[%s229 + $0x7c] sm:$0xf] %vm1378, %v1281
      %1411 = vst.msk [vmem:[%s229 + $0x80] sm:$0xf] %vm1378, %v1282
      %1412 = vst.msk [vmem:[%s229 + $0x84] sm:$0xf] %vm1378, %v1283
      %1413 = vst.msk [vmem:[%s229 + $0x88] sm:$0xf] %vm1378, %v1284
      %1414 = vst.msk [vmem:[%s229 + $0x8c] sm:$0xf] %vm1378, %v1285
      %1415 = vst.msk [vmem:[%s229 + $0x90] sm:$0xf] %vm1378, %v1286
      %1416 = vst.msk [vmem:[%s229 + $0x94] sm:$0xf] %vm1378, %v1287
      %1417 = vst.msk [vmem:[%s229 + $0x98] sm:$0xf] %vm1378, %v1288
      %1418 = vst.msk [vmem:[%s229 + $0x9c] sm:$0xf] %vm1378, %v1289
      %1419 = vst.msk [vmem:[%s229 + $0xa0] sm:$0xf] %vm1378, %v1290
      %1420 = vst.msk [vmem:[%s229 + $0xa4] sm:$0xf] %vm1378, %v1291
      %1421 = vst.msk [vmem:[%s229 + $0xa8] sm:$0xf] %vm1378, %v1292
      %1422 = vst.msk [vmem:[%s229 + $0xac] sm:$0xf] %vm1378, %v1293
      %1423 = vst.msk [vmem:[%s229 + $0xb0] sm:$0xf] %vm1378, %v1294
      %1424 = vst.msk [vmem:[%s229 + $0xb4] sm:$0xf] %vm1378, %v1295
      %1425 = vst.msk [vmem:[%s229 + $0xb8] sm:$0xf] %vm1378, %v1296
      %1426 = vst.msk [vmem:[%s229 + $0xbc] sm:$0xf] %vm1378, %v1297
      %1427 = vst.msk [vmem:[%s229 + $0xc0] sm:$0xf] %vm1378, %v1298
      %1428 = vst.msk [vmem:[%s229 + $0xc4] sm:$0xf] %vm1378, %v1299
      %1429 = vst.msk [vmem:[%s229 + $0xc8] sm:$0xf] %vm1378, %v1300
      %1430 = vst.msk [vmem:[%s229 + $0xcc] sm:$0xf] %vm1378, %v1301
      %1431 = vst.msk [vmem:[%s229 + $0xd0] sm:$0xf] %vm1378, %v1302
      %1432 = vst.msk [vmem:[%s229 + $0xd4] sm:$0xf] %vm1378, %v1303
      %1433 = vst.msk [vmem:[%s229 + $0xd8] sm:$0xf] %vm1378, %v1304
      %1434 = vst.msk [vmem:[%s229 + $0xdc] sm:$0xf] %vm1378, %v1305
      %1435 = vst.msk [vmem:[%s229 + $0xe0] sm:$0xf] %vm1378, %v1306
      %1436 = vst.msk [vmem:[%s229 + $0xe4] sm:$0xf] %vm1378, %v1307
      %1437 = vst.msk [vmem:[%s229 + $0xe8] sm:$0xf] %vm1378, %v1308
      %1438 = vst.msk [vmem:[%s229 + $0xec] sm:$0xf] %vm1378, %v1309
      %1439 = vst.msk [vmem:[%s229 + $0xf0] sm:$0xf] %vm1378, %v1310
      %1440 = vst.msk [vmem:[%s229 + $0xf4] sm:$0xf] %vm1378, %v1311
      %1441 = vst.msk [vmem:[%s229 + $0xf8] sm:$0xf] %vm1378, %v1312
      %1442 = vst.msk [vmem:[%s229 + $0xfc] sm:$0xf] %vm1378, %v1313
      %s1443 = smul.u32 64, %s18
      %p1444 = scmp.lt.s32.totalorder %s1443, 255
      %s1445 = scalar_select %p1444, %s1443, 255
      %p1446 = scmp.lt.s32.totalorder %s19, 0
      %s1447 = scalar_select %p1446, %s19, 0
      %s1448 = sadd.s32 %s1447, %s1445
      %s1449 = smul.addr %s1448, 4
      %s1450 = scalar_lea.vmem %s3, %s1449
      // Predicated region
      $region33: #{tpu_custom_call.1} parent=31 // pred_check
        %p1451 = pneg %p124
      $region34: #{tpu_custom_call.1} parent=31 // pred_check_branch
        %1453 = sbr.rel (%p1451) target = $region36
      $region35: #{tpu_custom_call.1} parent=31 // pred_region
        %s1454 = smul.u32 64, %s18
      $region36: #{tpu_custom_call.1} parent=31 // pred_fallthru
        _
    $region32: #{tpu_custom_call.1} parent=5 // pred_fallthru
      _
    %p1455 = scmp.le.s32.totalorder 2, %s9
    // Predicated region
    $region37: #{tpu_custom_call.1} parent=5 // pred_check
      %p1456 = pneg %p1455
    $region38: #{tpu_custom_call.1} parent=5 // pred_check_branch
      %1458 = sbr.rel (%p1456) target = $region40
    $region39: #{tpu_custom_call.1} parent=5 // pred_region
      %s1459 = ssub.s32 %s9, 2
      // Predicated region
      $region41: #{tpu_custom_call.1} parent=39 // pred_check
        %p1460 = pneg %p130
      $region42: #{tpu_custom_call.1} parent=39 // pred_check_branch
        %1462 = sbr.rel (%p1460) target = $region44
      $region43: #{tpu_custom_call.1} parent=39 // pred_region
        %s1463 = smul.u32 64, %s20
        %p1464 = scmp.lt.s32.totalorder %s1463, 255
        %s1465 = scalar_select %p1464, %s1463, 255
        %p1466 = scmp.lt.s32.totalorder %s21, 0
        %s1467 = scalar_select %p1466, %s21, 0
        %s1468 = sadd.s32 %s1467, %s1465
        %s1469 = smul.addr %s1468, 4
        %s1470 = scalar_lea.vmem %s3, %s1469
      $region44: #{tpu_custom_call.1} parent=39 // pred_fallthru
        _
    $region40: #{tpu_custom_call.1} parent=5 // pred_fallthru
      _
  $region6: #{tpu_custom_call.1} parent=0 // loop_footer
    %s13 = sadd.s32 1, %s9
  $region7: #{tpu_custom_call.1} parent=0 // loop_footer_branch
    %8 = sbr.rel target = $region3
  $region8: #{tpu_custom_call.1} parent=0 // loop_exit
    _

</llo_original>
